<compile_context>
chip_gen: v5e
topology: v5e:2x2
jax: 0.10.0
libtpu: 0.0.40
codegen_flags: <defaults>
</compile_context>

<pallas_src>
import functools

import jax
import jax.numpy as jnp
from jax import lax
from jax.experimental import pallas as pl
from jax.experimental.pallas import tpu as pltpu


def _advdiff_chunk_kernel(
    unroll,
    init_ref, v0_ref, ap_ref, am_ref, a0_ref, th_ref,
    w1u_ref, dtw2_ref, dtwf_ref, dtb2_ref, dtcb_ref,
    out_ref, u_s, v_s,
):
    """One (batch block, time chunk) grid step of the Euler integration.

    out_ref is the (TC, Bblk, G) slice of ode_sol for this chunk; (u, v=u@W1u)
    are carried across time chunks in VMEM scratch.
    """
    t_chunk = pl.program_id(1)
    TC, Bblk, G = out_ref.shape
    H = v_s.shape[1]

    # Chunk-invariant operands (live in vregs across the unrolled loop).
    w1u_bf = w1u_ref[...]        # (G, H)  bf16
    dtw2_bf = dtw2_ref[...]      # (H, G)  bf16, = dt * W2
    dtwf_bf = dtwf_ref[...]      # (H, H)  bf16, = dt * (W2 @ W1u)
    ap = ap_ref[...]             # (Bblk, G) dt-scaled stencil coeff for u[i+1]
    am = am_ref[...]             # (Bblk, G) ...                   for u[i-1]
    a0 = a0_ref[...]             # (Bblk, G) ...                   for u[i]
    dtb2 = jnp.broadcast_to(dtb2_ref[...], (Bblk, G))   # hoisted sublane bcast
    dtcb = jnp.broadcast_to(dtcb_ref[...], (Bblk, H))

    # First time chunk of this batch block: seed the carried state.
    @pl.when(t_chunk == 0)
    def _():
        u_s[...] = init_ref[...]
        v_s[...] = v0_ref[...]           # u0 @ W1u, computed in f32 in wrapper

    def step(j, carry):
        u, v = carry
        out_ref[j] = u                   # ode_sol[k] = y_k (k = chunk*TC + j)

        # neural correction (critical recurrence chain: tanh -> h@dtWf -> tanh)
        h = jnp.tanh(v + th_ref[j])      # th = ctx0@W1c + z@W1z + b1 + sin/cos
        hb = h.astype(jnp.bfloat16)

        # physics prior: dt * (dcoeff*lap - ccoeff*grad), periodic central FD,
        # stencil coefficients (incl. dt) hoisted -> 5 VPU ops off the chain
        u_p = pltpu.roll(u, shift=G - 1, axis=1)   # u[i+1]  (== jnp.roll(u, -1))
        u_m = pltpu.roll(u, shift=1, axis=1)       # u[i-1]  (== jnp.roll(u, +1))
        dphys = ap * u_p + am * u_m + a0 * u

        # Euler step: u_{k+1} = u_k + dt*(phys + h@W2 + b2)
        u_next = (u + dphys
                  + jnp.dot(hb, dtw2_bf, preferred_element_type=jnp.float32)
                  + dtb2)
        # carried pre-activation: v_{k+1} = u_{k+1} @ W1u  (off-chain matmuls)
        v_next = (v + dtcb
                  + jnp.dot(hb, dtwf_bf, preferred_element_type=jnp.float32)
                  + jnp.dot(dphys.astype(jnp.bfloat16), w1u_bf,
                            preferred_element_type=jnp.float32))
        return u_next, v_next

    u, v = lax.fori_loop(0, TC, step, (u_s[...], v_s[...]), unroll=unroll)
    u_s[...] = u
    v_s[...] = v


@functools.partial(jax.jit, static_argnames=("len_episode", "z_dim"))
def neural_advdiff_simulate(x, context, params, *, dt, dx, len_episode, z_dim):
    """Equivalent of NeuralAdvDiff.simulate(x, context) with the euler odeint."""
    B, G, _ = x.shape
    T = len_episode
    f32 = jnp.float32
    dt = jnp.asarray(dt, f32)

    # glue: slicing that forward() / simulate() do on the stored tensors
    init_cond = x[:, :, 0].astype(f32)     # (B, G)
    z = x[:, 0, -z_dim:]                   # (B, z_dim)
    dcoeff = context[:, :, 0]              # (B, G)
    ccoeff = context[:, :, 1]              # (B, G)
    ctx0 = context[:, 0, :]                # (B, C)

    w1u, w1c, w1s, w1co, w1z, b1, w2, b2 = params
    H = w1u.shape[1]

    # MLP pre-activation: time-invariant part + sin/cos time columns, one table.
    const_h = (ctx0 @ w1c + z @ w1z + b1).astype(f32)                   # (B, H)
    t_intg = jnp.arange(T, dtype=f32) * dt   # torch.linspace(0, dt*(T-1), T)
    th = (const_h[None]
          + jnp.sin(t_intg)[:, None, None] * w1s[None].astype(f32)
          + jnp.cos(t_intg)[:, None, None] * w1co[None].astype(f32))   # (T, B, H)

    # dt-scaled FD stencil coefficients (periodic central differences):
    # dt*phys = ap*u[i+1] + am*u[i-1] + a0*u[i]
    inv_dx2 = 1.0 / (dx * dx)
    inv_2dx = 1.0 / (2.0 * dx)
    ap = (dt * (dcoeff * inv_dx2 - ccoeff * inv_2dx)).astype(f32)
    am = (dt * (dcoeff * inv_dx2 + ccoeff * inv_2dx)).astype(f32)
    a0 = (dt * (-2.0 * dcoeff * inv_dx2)).astype(f32)

    # Pre-folded weights (dt baked in; bf16 MXU operands, f32 accumulation).
    w1u_bf = w1u.astype(jnp.bfloat16)
    dtw2_bf = (dt * w2).astype(jnp.bfloat16)
    dtwf_bf = (dt * (w2 @ w1u)).astype(jnp.bfloat16)
    dtb2 = (dt * b2).astype(f32)
    dtcb = (dt * (b2 @ w1u)).astype(f32)
    v0 = (init_cond @ w1u).astype(f32)     # f32 seed of the carried pre-activation

    # --- grid: (batch blocks ["parallel"], time chunks ["arbitrary"]) ---
    nb = 2 if (B % 16 == 0) else 1         # 2-way split feeds both v7x TCs
    bblk = B // nb
    tc = T if T <= 128 else 128            # bounded per-chunk VMEM for large T
    nt = pl.cdiv(T, tc)
    t_pad = nt * tc
    if t_pad != T:                         # padded steps are computed & discarded
        th = jnp.concatenate([th, jnp.zeros((t_pad - T, B, H), f32)], axis=0)
    unroll = max(1, min(tc, 8))            # bounded unroll; keeps LLO visibility

    bg = lambda b, t: (b, 0)
    w00 = lambda b, t: (0, 0)
    tb = lambda b, t: (t, b, 0)

    kernel = functools.partial(_advdiff_chunk_kernel, unroll)
    ode_sol = pl.pallas_call(
        kernel,
        out_shape=jax.ShapeDtypeStruct((t_pad, B, G), f32),
        grid_spec=pltpu.PrefetchScalarGridSpec(
            num_scalar_prefetch=0,
            grid=(nb, nt),
            in_specs=[
                pl.BlockSpec((bblk, G), bg),       # init_cond
                pl.BlockSpec((bblk, H), bg),       # v0 = init @ W1u
                pl.BlockSpec((bblk, G), bg),       # ap
                pl.BlockSpec((bblk, G), bg),       # am
                pl.BlockSpec((bblk, G), bg),       # a0
                pl.BlockSpec((tc, bblk, H), tb),   # th table (per time chunk)
                pl.BlockSpec((G, H), w00),         # W1u            (bf16)
                pl.BlockSpec((H, G), w00),         # dt*W2          (bf16)
                pl.BlockSpec((H, H), w00),         # dt*W2@W1u      (bf16)
                pl.BlockSpec((1, G), w00),         # dt*b2
                pl.BlockSpec((1, H), w00),         # dt*b2@W1u
            ],
            out_specs=pl.BlockSpec((tc, bblk, G), tb),
            scratch_shapes=[pltpu.VMEM((bblk, G), f32),   # carried state u_k
                            pltpu.VMEM((bblk, H), f32)],  # carried v_k = u_k@W1u
        ),
        compiler_params=pltpu.CompilerParams(
            dimension_semantics=("parallel", "arbitrary")),
    )(init_cond, v0, ap, am, a0, th, w1u_bf, dtw2_bf, dtwf_bf, dtb2, dtcb)

    # Y = ode_sol.permute(1, 2, 0) -- keep the tiny transpose in the (jitted)
    # wrapper so the kernel stores stay lane-dense (last dim = G = 128).
    return jnp.transpose(ode_sol[:T], (1, 2, 0))


def reference_simulate(x, context, params, *, dt, dx, len_episode, z_dim):
    """Pure-JAX f32 reference (mirrors the PyTorch forward + euler odeint)."""
    init_cond = x[:, :, 0]
    z = x[:, 0, -z_dim:]
    dcoeff = context[:, :, 0]
    ccoeff = context[:, :, 1]
    ctx0 = context[:, 0, :]
    w1u, w1c, w1s, w1co, w1z, b1, w2, b2 = params
    t_intg = jnp.arange(len_episode, dtype=jnp.float32) * jnp.float32(dt)

    def f(t, u):
        u_p = jnp.roll(u, -1, axis=1)
        u_m = jnp.roll(u, 1, axis=1)
        lap = (u_p - 2.0 * u + u_m) / (dx * dx)
        grd = (u_p - u_m) / (2.0 * dx)
        phys = dcoeff * lap - ccoeff * grd
        h = jnp.tanh(
            u @ w1u + ctx0 @ w1c + jnp.sin(t) * w1s + jnp.cos(t) * w1co + z @ w1z + b1
        )
        return phys + (h @ w2 + b2)

    sols = [init_cond]
    u = init_cond
    for k in range(len_episode - 1):
        u = u + dt * f(t_intg[k], u)
        sols.append(u)
    return jnp.transpose(jnp.stack(sols, axis=0), (1, 2, 0))


if __name__ == "__main__":
    # small shapes consistent with the module: batch of trajectories, 1-D grid.
    # B=16 exercises the 2-way "parallel" batch split (both v7x TensorCores).
    B, G, T = 16, 128, 8          # n_samples, n_grids, len_episode
    z_dim, ctx_dim, H = 2, 2, 32  # latent dim, context channels, nnet hidden
    dt, dx = 0.05, 0.5

    key = jax.random.PRNGKey(0)
    ks = jax.random.split(key, 9)

    # x carries z appended along the last (time) axis, as in predict()
    x = jax.random.normal(ks[0], (B, G, T + z_dim), jnp.float32)
    # context = (diffusion coeff, convection coeff), positive
    context = jax.random.uniform(ks[1], (B, G, ctx_dim), jnp.float32,
                                 minval=0.1, maxval=0.5)

    scale = 0.1
    w1u = scale * jax.random.normal(ks[2], (G, H), jnp.float32)
    w1c = scale * jax.random.normal(ks[3], (ctx_dim, H), jnp.float32)
    w1s = scale * jax.random.normal(ks[4], (1, H), jnp.float32)
    w1co = scale * jax.random.normal(ks[5], (1, H), jnp.float32)
    w1z = scale * jax.random.normal(ks[6], (z_dim, H), jnp.float32)
    b1 = jnp.zeros((1, H), jnp.float32)
    w2 = scale * jax.random.normal(ks[7], (H, G), jnp.float32)
    b2 = jnp.zeros((1, G), jnp.float32)
    params = (w1u, w1c, w1s, w1co, w1z, b1, w2, b2)

    y = neural_advdiff_simulate(x, context, params, dt=dt, dx=dx,
                                len_episode=T, z_dim=z_dim)
    y = jax.block_until_ready(y)

    y_ref = reference_simulate(x, context, params, dt=dt, dx=dx,
                               len_episode=T, z_dim=z_dim)
    assert y.shape == (B, G, T), y.shape
    # bf16 MXU operands (f32 accumulation) cost ~2^-9 relative per matmul;
    # observed error is well inside 5e-3 at these shapes.
    err = float(jnp.max(jnp.abs(y - y_ref)))
    assert jnp.allclose(y, y_ref, rtol=5e-3, atol=5e-3), err
    print("KERNEL_OK")
</pallas_src>

<mosaic_0001>
module attributes {stable_mosaic.version = 11 : i64} {
  func.func @_advdiff_chunk_kernel(%arg0: i32, %arg1: i32, %arg2: memref<8x128xf32, #tpu.memory_space<vmem>>, %arg3: memref<8x32xf32, #tpu.memory_space<vmem>>, %arg4: memref<8x128xf32, #tpu.memory_space<vmem>>, %arg5: memref<8x128xf32, #tpu.memory_space<vmem>>, %arg6: memref<8x128xf32, #tpu.memory_space<vmem>>, %arg7: memref<8x8x32xf32, #tpu.memory_space<vmem>>, %arg8: memref<128x32xbf16, #tpu.memory_space<vmem>>, %arg9: memref<32x128xbf16, #tpu.memory_space<vmem>>, %arg10: memref<32x32xbf16, #tpu.memory_space<vmem>>, %arg11: memref<1x128xf32, #tpu.memory_space<vmem>>, %arg12: memref<1x32xf32, #tpu.memory_space<vmem>>, %arg13: memref<8x8x128xf32, #tpu.memory_space<vmem>>, %arg14: memref<8x128xf32, #tpu.memory_space<vmem>>, %arg15: memref<8x32xf32, #tpu.memory_space<vmem>>) attributes {dimension_semantics = [#tpu.dimension_semantics<parallel>, #tpu.dimension_semantics<arbitrary>], iteration_bounds = array<i64: 2, 1>, scalar_prefetch = 0 : i64, scratch_operands = 2 : i64, tpu.core_type = #tpu.core_type<tc>, window_params = [{transform_indices = @transform_0, window_bounds = array<i64: 8, 128>}, {transform_indices = @transform_1, window_bounds = array<i64: 8, 32>}, {transform_indices = @transform_2, window_bounds = array<i64: 8, 128>}, {transform_indices = @transform_3, window_bounds = array<i64: 8, 128>}, {transform_indices = @transform_4, window_bounds = array<i64: 8, 128>}, {transform_indices = @transform_5, window_bounds = array<i64: 8, 8, 32>}, {pipeline_mode = #tpu.pipeline_mode<synchronous>, transform_indices = @transform_6, window_bounds = array<i64: 128, 32>}, {pipeline_mode = #tpu.pipeline_mode<synchronous>, transform_indices = @transform_7, window_bounds = array<i64: 32, 128>}, {pipeline_mode = #tpu.pipeline_mode<synchronous>, transform_indices = @transform_8, window_bounds = array<i64: 32, 32>}, {pipeline_mode = #tpu.pipeline_mode<synchronous>, transform_indices = @transform_9, window_bounds = array<i64: 1, 128>}, {pipeline_mode = #tpu.pipeline_mode<synchronous>, transform_indices = @transform_10, window_bounds = array<i64: 1, 32>}, {transform_indices = @transform_11, window_bounds = array<i64: 8, 8, 128>}]} {
    %c0 = arith.constant 0 : index
    %c0_0 = arith.constant 0 : index
    %0 = vector.load %arg8[%c0, %c0_0] : memref<128x32xbf16, #tpu.memory_space<vmem>>, vector<128x32xbf16>
    %c0_1 = arith.constant 0 : index
    %c0_2 = arith.constant 0 : index
    %1 = vector.load %arg9[%c0_1, %c0_2] : memref<32x128xbf16, #tpu.memory_space<vmem>>, vector<32x128xbf16>
    %c0_3 = arith.constant 0 : index
    %c0_4 = arith.constant 0 : index
    %2 = vector.load %arg10[%c0_3, %c0_4] : memref<32x32xbf16, #tpu.memory_space<vmem>>, vector<32x32xbf16>
    %c0_5 = arith.constant 0 : index
    %c0_6 = arith.constant 0 : index
    %3 = vector.load %arg4[%c0_5, %c0_6] : memref<8x128xf32, #tpu.memory_space<vmem>>, vector<8x128xf32>
    %c0_7 = arith.constant 0 : index
    %c0_8 = arith.constant 0 : index
    %4 = vector.load %arg5[%c0_7, %c0_8] : memref<8x128xf32, #tpu.memory_space<vmem>>, vector<8x128xf32>
    %c0_9 = arith.constant 0 : index
    %c0_10 = arith.constant 0 : index
    %5 = vector.load %arg6[%c0_9, %c0_10] : memref<8x128xf32, #tpu.memory_space<vmem>>, vector<8x128xf32>
    %c0_11 = arith.constant 0 : index
    %c0_12 = arith.constant 0 : index
    %6 = vector.load %arg11[%c0_11, %c0_12] : memref<1x128xf32, #tpu.memory_space<vmem>>, vector<1x128xf32>
    %7 = vector.shape_cast %6 : vector<1x128xf32> to vector<1x128xf32>
    %8 = vector.broadcast %7 : vector<1x128xf32> to vector<8x128xf32>
    %c0_13 = arith.constant 0 : index
    %c0_14 = arith.constant 0 : index
    %9 = vector.load %arg12[%c0_13, %c0_14] : memref<1x32xf32, #tpu.memory_space<vmem>>, vector<1x32xf32>
    %10 = vector.shape_cast %9 : vector<1x32xf32> to vector<1x32xf32>
    %11 = vector.broadcast %10 : vector<1x32xf32> to vector<8x32xf32>
    %c0_i32 = arith.constant 0 : i32
    %12 = arith.cmpi eq, %arg1, %c0_i32 : i32
    %13 = arith.extui %12 : i1 to i32
    %c0_i32_15 = arith.constant 0 : i32
    %14 = arith.cmpi ne, %13, %c0_i32_15 : i32
    scf.if %14 {
      %c0_95 = arith.constant 0 : index
      %c0_96 = arith.constant 0 : index
      %235 = vector.load %arg2[%c0_95, %c0_96] : memref<8x128xf32, #tpu.memory_space<vmem>>, vector<8x128xf32>
      %c0_97 = arith.constant 0 : index
      %c0_98 = arith.constant 0 : index
      %236 = vector.load %arg14[%c0_97, %c0_98] : memref<8x128xf32, #tpu.memory_space<vmem>>, vector<8x128xf32>
      tpu.vector_store %arg14[%c0_97, %c0_98], %235 {strides = array<i32>} : memref<8x128xf32, #tpu.memory_space<vmem>>, vector<8x128xf32>,
      %c0_99 = arith.constant 0 : index
      %c0_100 = arith.constant 0 : index
      %237 = vector.load %arg3[%c0_99, %c0_100] : memref<8x32xf32, #tpu.memory_space<vmem>>, vector<8x32xf32>
      %c0_101 = arith.constant 0 : index
      %c0_102 = arith.constant 0 : index
      %238 = vector.load %arg15[%c0_101, %c0_102] : memref<8x32xf32, #tpu.memory_space<vmem>>, vector<8x32xf32>
      tpu.vector_store %arg15[%c0_101, %c0_102], %237 {strides = array<i32>} : memref<8x32xf32, #tpu.memory_space<vmem>>, vector<8x32xf32>,
    } else {
    }
    %c0_16 = arith.constant 0 : index
    %c0_17 = arith.constant 0 : index
    %15 = vector.load %arg14[%c0_16, %c0_17] : memref<8x128xf32, #tpu.memory_space<vmem>>, vector<8x128xf32>
    %c0_18 = arith.constant 0 : index
    %c0_19 = arith.constant 0 : index
    %16 = vector.load %arg15[%c0_18, %c0_19] : memref<8x32xf32, #tpu.memory_space<vmem>>, vector<8x32xf32>
    %c0_i32_20 = arith.constant 0 : i32
    %17 = arith.index_cast %c0_i32_20 : i32 to index
    %c0_21 = arith.constant 0 : index
    %c0_22 = arith.constant 0 : index
    %18 = vector.load %arg13[%17, %c0_21, %c0_22] : memref<8x8x128xf32, #tpu.memory_space<vmem>>, vector<1x8x128xf32>
    %19 = vector.shape_cast %18 : vector<1x8x128xf32> to vector<8x128xf32>
    %20 = vector.shape_cast %15 : vector<8x128xf32> to vector<1x8x128xf32>
    tpu.vector_store %arg13[%17, %c0_21, %c0_22], %20 {strides = array<i32>} : memref<8x8x128xf32, #tpu.memory_space<vmem>>, vector<1x8x128xf32>,
    %21 = arith.index_cast %c0_i32_20 : i32 to index
    %c0_23 = arith.constant 0 : index
    %c0_24 = arith.constant 0 : index
    %22 = vector.load %arg7[%21, %c0_23, %c0_24] : memref<8x8x32xf32, #tpu.memory_space<vmem>>, vector<1x8x32xf32>
    %23 = vector.shape_cast %22 : vector<1x8x32xf32> to vector<8x32xf32>
    %24 = arith.addf %16, %23 : vector<8x32xf32>
    %25 = math.tanh %24 : vector<8x32xf32>
    %26 = arith.truncf %25 : vector<8x32xf32> to vector<8x32xbf16>
    %c127_i32 = arith.constant 127 : i32
    %27 = tpu.dynamic_rotate %15 by %c127_i32 dim 1 : vector<8x128xf32>, i32 -> vector<8x128xf32>
    %c1_i32 = arith.constant 1 : i32
    %28 = tpu.dynamic_rotate %15 by %c1_i32 dim 1 : vector<8x128xf32>, i32 -> vector<8x128xf32>
    %29 = arith.mulf %3, %27 : vector<8x128xf32>
    %30 = arith.mulf %4, %28 : vector<8x128xf32>
    %31 = arith.addf %29, %30 : vector<8x128xf32>
    %32 = arith.mulf %5, %15 : vector<8x128xf32>
    %33 = arith.addf %31, %32 : vector<8x128xf32>
    %34 = arith.addf %15, %33 : vector<8x128xf32>
    %cst = arith.constant dense<0.000000e+00> : vector<8x128xf32>
    %35 = tpu.matmul %26, %1, %cst {dimension_numbers = #tpu.dot_dimension_numbers<[1], [0], [0], [1], [0, 0, 1, 1], [], []>} : vector<8x32xbf16>, vector<32x128xbf16>, vector<8x128xf32> -> vector<8x128xf32>
    %36 = arith.addf %34, %35 : vector<8x128xf32>
    %37 = arith.addf %36, %8 : vector<8x128xf32>
    %38 = arith.addf %16, %11 : vector<8x32xf32>
    %cst_25 = arith.constant dense<0.000000e+00> : vector<8x32xf32>
    %39 = tpu.matmul %26, %2, %cst_25 {dimension_numbers = #tpu.dot_dimension_numbers<[1], [0], [0], [1], [0, 0, 1, 1], [], []>} : vector<8x32xbf16>, vector<32x32xbf16>, vector<8x32xf32> -> vector<8x32xf32>
    %40 = arith.addf %38, %39 : vector<8x32xf32>
    %41 = arith.truncf %33 : vector<8x128xf32> to vector<8x128xbf16>
    %cst_26 = arith.constant dense<0.000000e+00> : vector<8x32xf32>
    %42 = tpu.matmul %41, %0, %cst_26 {dimension_numbers = #tpu.dot_dimension_numbers<[1], [0], [0], [1], [0, 0, 1, 1], [], []>} : vector<8x128xbf16>, vector<128x32xbf16>, vector<8x32xf32> -> vector<8x32xf32>
    %43 = arith.addf %40, %42 : vector<8x32xf32>
    %c1_i32_27 = arith.constant 1 : i32
    %44 = arith.index_cast %c1_i32_27 : i32 to index
    %c0_28 = arith.constant 0 : index
    %c0_29 = arith.constant 0 : index
    %45 = vector.load %arg13[%44, %c0_28, %c0_29] : memref<8x8x128xf32, #tpu.memory_space<vmem>>, vector<1x8x128xf32>
    %46 = vector.shape_cast %45 : vector<1x8x128xf32> to vector<8x128xf32>
    %47 = vector.shape_cast %37 : vector<8x128xf32> to vector<1x8x128xf32>
    tpu.vector_store %arg13[%44, %c0_28, %c0_29], %47 {strides = array<i32>} : memref<8x8x128xf32, #tpu.memory_space<vmem>>, vector<1x8x128xf32>,
    %48 = arith.index_cast %c1_i32_27 : i32 to index
    %c0_30 = arith.constant 0 : index
    %c0_31 = arith.constant 0 : index
    %49 = vector.load %arg7[%48, %c0_30, %c0_31] : memref<8x8x32xf32, #tpu.memory_space<vmem>>, vector<1x8x32xf32>
    %50 = vector.shape_cast %49 : vector<1x8x32xf32> to vector<8x32xf32>
    %51 = arith.addf %43, %50 : vector<8x32xf32>
    %52 = math.tanh %51 : vector<8x32xf32>
    %53 = arith.truncf %52 : vector<8x32xf32> to vector<8x32xbf16>
    %c127_i32_32 = arith.constant 127 : i32
    %54 = tpu.dynamic_rotate %37 by %c127_i32_32 dim 1 : vector<8x128xf32>, i32 -> vector<8x128xf32>
    %c1_i32_33 = arith.constant 1 : i32
    %55 = tpu.dynamic_rotate %37 by %c1_i32_33 dim 1 : vector<8x128xf32>, i32 -> vector<8x128xf32>
    %56 = arith.mulf %3, %54 : vector<8x128xf32>
    %57 = arith.mulf %4, %55 : vector<8x128xf32>
    %58 = arith.addf %56, %57 : vector<8x128xf32>
    %59 = arith.mulf %5, %37 : vector<8x128xf32>
    %60 = arith.addf %58, %59 : vector<8x128xf32>
    %61 = arith.addf %37, %60 : vector<8x128xf32>
    %cst_34 = arith.constant dense<0.000000e+00> : vector<8x128xf32>
    %62 = tpu.matmul %53, %1, %cst_34 {dimension_numbers = #tpu.dot_dimension_numbers<[1], [0], [0], [1], [0, 0, 1, 1], [], []>} : vector<8x32xbf16>, vector<32x128xbf16>, vector<8x128xf32> -> vector<8x128xf32>
    %63 = arith.addf %61, %62 : vector<8x128xf32>
    %64 = arith.addf %63, %8 : vector<8x128xf32>
    %65 = arith.addf %43, %11 : vector<8x32xf32>
    %cst_35 = arith.constant dense<0.000000e+00> : vector<8x32xf32>
    %66 = tpu.matmul %53, %2, %cst_35 {dimension_numbers = #tpu.dot_dimension_numbers<[1], [0], [0], [1], [0, 0, 1, 1], [], []>} : vector<8x32xbf16>, vector<32x32xbf16>, vector<8x32xf32> -> vector<8x32xf32>
    %67 = arith.addf %65, %66 : vector<8x32xf32>
    %68 = arith.truncf %60 : vector<8x128xf32> to vector<8x128xbf16>
    %cst_36 = arith.constant dense<0.000000e+00> : vector<8x32xf32>
    %69 = tpu.matmul %68, %0, %cst_36 {dimension_numbers = #tpu.dot_dimension_numbers<[1], [0], [0], [1], [0, 0, 1, 1], [], []>} : vector<8x128xbf16>, vector<128x32xbf16>, vector<8x32xf32> -> vector<8x32xf32>
    %70 = arith.addf %67, %69 : vector<8x32xf32>
    %c2_i32 = arith.constant 2 : i32
    %71 = arith.index_cast %c2_i32 : i32 to index
    %c0_37 = arith.constant 0 : index
    %c0_38 = arith.constant 0 : index
    %72 = vector.load %arg13[%71, %c0_37, %c0_38] : memref<8x8x128xf32, #tpu.memory_space<vmem>>, vector<1x8x128xf32>
    %73 = vector.shape_cast %72 : vector<1x8x128xf32> to vector<8x128xf32>
    %74 = vector.shape_cast %64 : vector<8x128xf32> to vector<1x8x128xf32>
    tpu.vector_store %arg13[%71, %c0_37, %c0_38], %74 {strides = array<i32>} : memref<8x8x128xf32, #tpu.memory_space<vmem>>, vector<1x8x128xf32>,
    %75 = arith.index_cast %c2_i32 : i32 to index
    %c0_39 = arith.constant 0 : index
    %c0_40 = arith.constant 0 : index
    %76 = vector.load %arg7[%75, %c0_39, %c0_40] : memref<8x8x32xf32, #tpu.memory_space<vmem>>, vector<1x8x32xf32>
    %77 = vector.shape_cast %76 : vector<1x8x32xf32> to vector<8x32xf32>
    %78 = arith.addf %70, %77 : vector<8x32xf32>
    %79 = math.tanh %78 : vector<8x32xf32>
    %80 = arith.truncf %79 : vector<8x32xf32> to vector<8x32xbf16>
    %c127_i32_41 = arith.constant 127 : i32
    %81 = tpu.dynamic_rotate %64 by %c127_i32_41 dim 1 : vector<8x128xf32>, i32 -> vector<8x128xf32>
    %c1_i32_42 = arith.constant 1 : i32
    %82 = tpu.dynamic_rotate %64 by %c1_i32_42 dim 1 : vector<8x128xf32>, i32 -> vector<8x128xf32>
    %83 = arith.mulf %3, %81 : vector<8x128xf32>
    %84 = arith.mulf %4, %82 : vector<8x128xf32>
    %85 = arith.addf %83, %84 : vector<8x128xf32>
    %86 = arith.mulf %5, %64 : vector<8x128xf32>
    %87 = arith.addf %85, %86 : vector<8x128xf32>
    %88 = arith.addf %64, %87 : vector<8x128xf32>
    %cst_43 = arith.constant dense<0.000000e+00> : vector<8x128xf32>
    %89 = tpu.matmul %80, %1, %cst_43 {dimension_numbers = #tpu.dot_dimension_numbers<[1], [0], [0], [1], [0, 0, 1, 1], [], []>} : vector<8x32xbf16>, vector<32x128xbf16>, vector<8x128xf32> -> vector<8x128xf32>
    %90 = arith.addf %88, %89 : vector<8x128xf32>
    %91 = arith.addf %90, %8 : vector<8x128xf32>
    %92 = arith.addf %70, %11 : vector<8x32xf32>
    %cst_44 = arith.constant dense<0.000000e+00> : vector<8x32xf32>
    %93 = tpu.matmul %80, %2, %cst_44 {dimension_numbers = #tpu.dot_dimension_numbers<[1], [0], [0], [1], [0, 0, 1, 1], [], []>} : vector<8x32xbf16>, vector<32x32xbf16>, vector<8x32xf32> -> vector<8x32xf32>
    %94 = arith.addf %92, %93 : vector<8x32xf32>
    %95 = arith.truncf %87 : vector<8x128xf32> to vector<8x128xbf16>
    %cst_45 = arith.constant dense<0.000000e+00> : vector<8x32xf32>
    %96 = tpu.matmul %95, %0, %cst_45 {dimension_numbers = #tpu.dot_dimension_numbers<[1], [0], [0], [1], [0, 0, 1, 1], [], []>} : vector<8x128xbf16>, vector<128x32xbf16>, vector<8x32xf32> -> vector<8x32xf32>
    %97 = arith.addf %94, %96 : vector<8x32xf32>
    %c3_i32 = arith.constant 3 : i32
    %98 = arith.index_cast %c3_i32 : i32 to index
    %c0_46 = arith.constant 0 : index
    %c0_47 = arith.constant 0 : index
    %99 = vector.load %arg13[%98, %c0_46, %c0_47] : memref<8x8x128xf32, #tpu.memory_space<vmem>>, vector<1x8x128xf32>
    %100 = vector.shape_cast %99 : vector<1x8x128xf32> to vector<8x128xf32>
    %101 = vector.shape_cast %91 : vector<8x128xf32> to vector<1x8x128xf32>
    tpu.vector_store %arg13[%98, %c0_46, %c0_47], %101 {strides = array<i32>} : memref<8x8x128xf32, #tpu.memory_space<vmem>>, vector<1x8x128xf32>,
    %102 = arith.index_cast %c3_i32 : i32 to index
    %c0_48 = arith.constant 0 : index
    %c0_49 = arith.constant 0 : index
    %103 = vector.load %arg7[%102, %c0_48, %c0_49] : memref<8x8x32xf32, #tpu.memory_space<vmem>>, vector<1x8x32xf32>
    %104 = vector.shape_cast %103 : vector<1x8x32xf32> to vector<8x32xf32>
    %105 = arith.addf %97, %104 : vector<8x32xf32>
    %106 = math.tanh %105 : vector<8x32xf32>
    %107 = arith.truncf %106 : vector<8x32xf32> to vector<8x32xbf16>
    %c127_i32_50 = arith.constant 127 : i32
    %108 = tpu.dynamic_rotate %91 by %c127_i32_50 dim 1 : vector<8x128xf32>, i32 -> vector<8x128xf32>
    %c1_i32_51 = arith.constant 1 : i32
    %109 = tpu.dynamic_rotate %91 by %c1_i32_51 dim 1 : vector<8x128xf32>, i32 -> vector<8x128xf32>
    %110 = arith.mulf %3, %108 : vector<8x128xf32>
    %111 = arith.mulf %4, %109 : vector<8x128xf32>
    %112 = arith.addf %110, %111 : vector<8x128xf32>
    %113 = arith.mulf %5, %91 : vector<8x128xf32>
    %114 = arith.addf %112, %113 : vector<8x128xf32>
    %115 = arith.addf %91, %114 : vector<8x128xf32>
    %cst_52 = arith.constant dense<0.000000e+00> : vector<8x128xf32>
    %116 = tpu.matmul %107, %1, %cst_52 {dimension_numbers = #tpu.dot_dimension_numbers<[1], [0], [0], [1], [0, 0, 1, 1], [], []>} : vector<8x32xbf16>, vector<32x128xbf16>, vector<8x128xf32> -> vector<8x128xf32>
    %117 = arith.addf %115, %116 : vector<8x128xf32>
    %118 = arith.addf %117, %8 : vector<8x128xf32>
    %119 = arith.addf %97, %11 : vector<8x32xf32>
    %cst_53 = arith.constant dense<0.000000e+00> : vector<8x32xf32>
    %120 = tpu.matmul %107, %2, %cst_53 {dimension_numbers = #tpu.dot_dimension_numbers<[1], [0], [0], [1], [0, 0, 1, 1], [], []>} : vector<8x32xbf16>, vector<32x32xbf16>, vector<8x32xf32> -> vector<8x32xf32>
    %121 = arith.addf %119, %120 : vector<8x32xf32>
    %122 = arith.truncf %114 : vector<8x128xf32> to vector<8x128xbf16>
    %cst_54 = arith.constant dense<0.000000e+00> : vector<8x32xf32>
    %123 = tpu.matmul %122, %0, %cst_54 {dimension_numbers = #tpu.dot_dimension_numbers<[1], [0], [0], [1], [0, 0, 1, 1], [], []>} : vector<8x128xbf16>, vector<128x32xbf16>, vector<8x32xf32> -> vector<8x32xf32>
    %124 = arith.addf %121, %123 : vector<8x32xf32>
    %c4_i32 = arith.constant 4 : i32
    %125 = arith.index_cast %c4_i32 : i32 to index
    %c0_55 = arith.constant 0 : index
    %c0_56 = arith.constant 0 : index
    %126 = vector.load %arg13[%125, %c0_55, %c0_56] : memref<8x8x128xf32, #tpu.memory_space<vmem>>, vector<1x8x128xf32>
    %127 = vector.shape_cast %126 : vector<1x8x128xf32> to vector<8x128xf32>
    %128 = vector.shape_cast %118 : vector<8x128xf32> to vector<1x8x128xf32>
    tpu.vector_store %arg13[%125, %c0_55, %c0_56], %128 {strides = array<i32>} : memref<8x8x128xf32, #tpu.memory_space<vmem>>, vector<1x8x128xf32>,
    %129 = arith.index_cast %c4_i32 : i32 to index
    %c0_57 = arith.constant 0 : index
    %c0_58 = arith.constant 0 : index
    %130 = vector.load %arg7[%129, %c0_57, %c0_58] : memref<8x8x32xf32, #tpu.memory_space<vmem>>, vector<1x8x32xf32>
    %131 = vector.shape_cast %130 : vector<1x8x32xf32> to vector<8x32xf32>
    %132 = arith.addf %124, %131 : vector<8x32xf32>
    %133 = math.tanh %132 : vector<8x32xf32>
    %134 = arith.truncf %133 : vector<8x32xf32> to vector<8x32xbf16>
    %c127_i32_59 = arith.constant 127 : i32
    %135 = tpu.dynamic_rotate %118 by %c127_i32_59 dim 1 : vector<8x128xf32>, i32 -> vector<8x128xf32>
    %c1_i32_60 = arith.constant 1 : i32
    %136 = tpu.dynamic_rotate %118 by %c1_i32_60 dim 1 : vector<8x128xf32>, i32 -> vector<8x128xf32>
    %137 = arith.mulf %3, %135 : vector<8x128xf32>
    %138 = arith.mulf %4, %136 : vector<8x128xf32>
    %139 = arith.addf %137, %138 : vector<8x128xf32>
    %140 = arith.mulf %5, %118 : vector<8x128xf32>
    %141 = arith.addf %139, %140 : vector<8x128xf32>
    %142 = arith.addf %118, %141 : vector<8x128xf32>
    %cst_61 = arith.constant dense<0.000000e+00> : vector<8x128xf32>
    %143 = tpu.matmul %134, %1, %cst_61 {dimension_numbers = #tpu.dot_dimension_numbers<[1], [0], [0], [1], [0, 0, 1, 1], [], []>} : vector<8x32xbf16>, vector<32x128xbf16>, vector<8x128xf32> -> vector<8x128xf32>
    %144 = arith.addf %142, %143 : vector<8x128xf32>
    %145 = arith.addf %144, %8 : vector<8x128xf32>
    %146 = arith.addf %124, %11 : vector<8x32xf32>
    %cst_62 = arith.constant dense<0.000000e+00> : vector<8x32xf32>
    %147 = tpu.matmul %134, %2, %cst_62 {dimension_numbers = #tpu.dot_dimension_numbers<[1], [0], [0], [1], [0, 0, 1, 1], [], []>} : vector<8x32xbf16>, vector<32x32xbf16>, vector<8x32xf32> -> vector<8x32xf32>
    %148 = arith.addf %146, %147 : vector<8x32xf32>
    %149 = arith.truncf %141 : vector<8x128xf32> to vector<8x128xbf16>
    %cst_63 = arith.constant dense<0.000000e+00> : vector<8x32xf32>
    %150 = tpu.matmul %149, %0, %cst_63 {dimension_numbers = #tpu.dot_dimension_numbers<[1], [0], [0], [1], [0, 0, 1, 1], [], []>} : vector<8x128xbf16>, vector<128x32xbf16>, vector<8x32xf32> -> vector<8x32xf32>
    %151 = arith.addf %148, %150 : vector<8x32xf32>
    %c5_i32 = arith.constant 5 : i32
    %152 = arith.index_cast %c5_i32 : i32 to index
    %c0_64 = arith.constant 0 : index
    %c0_65 = arith.constant 0 : index
    %153 = vector.load %arg13[%152, %c0_64, %c0_65] : memref<8x8x128xf32, #tpu.memory_space<vmem>>, vector<1x8x128xf32>
    %154 = vector.shape_cast %153 : vector<1x8x128xf32> to vector<8x128xf32>
    %155 = vector.shape_cast %145 : vector<8x128xf32> to vector<1x8x128xf32>
    tpu.vector_store %arg13[%152, %c0_64, %c0_65], %155 {strides = array<i32>} : memref<8x8x128xf32, #tpu.memory_space<vmem>>, vector<1x8x128xf32>,
    %156 = arith.index_cast %c5_i32 : i32 to index
    %c0_66 = arith.constant 0 : index
    %c0_67 = arith.constant 0 : index
    %157 = vector.load %arg7[%156, %c0_66, %c0_67] : memref<8x8x32xf32, #tpu.memory_space<vmem>>, vector<1x8x32xf32>
    %158 = vector.shape_cast %157 : vector<1x8x32xf32> to vector<8x32xf32>
    %159 = arith.addf %151, %158 : vector<8x32xf32>
    %160 = math.tanh %159 : vector<8x32xf32>
    %161 = arith.truncf %160 : vector<8x32xf32> to vector<8x32xbf16>
    %c127_i32_68 = arith.constant 127 : i32
    %162 = tpu.dynamic_rotate %145 by %c127_i32_68 dim 1 : vector<8x128xf32>, i32 -> vector<8x128xf32>
    %c1_i32_69 = arith.constant 1 : i32
    %163 = tpu.dynamic_rotate %145 by %c1_i32_69 dim 1 : vector<8x128xf32>, i32 -> vector<8x128xf32>
    %164 = arith.mulf %3, %162 : vector<8x128xf32>
    %165 = arith.mulf %4, %163 : vector<8x128xf32>
    %166 = arith.addf %164, %165 : vector<8x128xf32>
    %167 = arith.mulf %5, %145 : vector<8x128xf32>
    %168 = arith.addf %166, %167 : vector<8x128xf32>
    %169 = arith.addf %145, %168 : vector<8x128xf32>
    %cst_70 = arith.constant dense<0.000000e+00> : vector<8x128xf32>
    %170 = tpu.matmul %161, %1, %cst_70 {dimension_numbers = #tpu.dot_dimension_numbers<[1], [0], [0], [1], [0, 0, 1, 1], [], []>} : vector<8x32xbf16>, vector<32x128xbf16>, vector<8x128xf32> -> vector<8x128xf32>
    %171 = arith.addf %169, %170 : vector<8x128xf32>
    %172 = arith.addf %171, %8 : vector<8x128xf32>
    %173 = arith.addf %151, %11 : vector<8x32xf32>
    %cst_71 = arith.constant dense<0.000000e+00> : vector<8x32xf32>
    %174 = tpu.matmul %161, %2, %cst_71 {dimension_numbers = #tpu.dot_dimension_numbers<[1], [0], [0], [1], [0, 0, 1, 1], [], []>} : vector<8x32xbf16>, vector<32x32xbf16>, vector<8x32xf32> -> vector<8x32xf32>
    %175 = arith.addf %173, %174 : vector<8x32xf32>
    %176 = arith.truncf %168 : vector<8x128xf32> to vector<8x128xbf16>
    %cst_72 = arith.constant dense<0.000000e+00> : vector<8x32xf32>
    %177 = tpu.matmul %176, %0, %cst_72 {dimension_numbers = #tpu.dot_dimension_numbers<[1], [0], [0], [1], [0, 0, 1, 1], [], []>} : vector<8x128xbf16>, vector<128x32xbf16>, vector<8x32xf32> -> vector<8x32xf32>
    %178 = arith.addf %175, %177 : vector<8x32xf32>
    %c6_i32 = arith.constant 6 : i32
    %179 = arith.index_cast %c6_i32 : i32 to index
    %c0_73 = arith.constant 0 : index
    %c0_74 = arith.constant 0 : index
    %180 = vector.load %arg13[%179, %c0_73, %c0_74] : memref<8x8x128xf32, #tpu.memory_space<vmem>>, vector<1x8x128xf32>
    %181 = vector.shape_cast %180 : vector<1x8x128xf32> to vector<8x128xf32>
    %182 = vector.shape_cast %172 : vector<8x128xf32> to vector<1x8x128xf32>
    tpu.vector_store %arg13[%179, %c0_73, %c0_74], %182 {strides = array<i32>} : memref<8x8x128xf32, #tpu.memory_space<vmem>>, vector<1x8x128xf32>,
    %183 = arith.index_cast %c6_i32 : i32 to index
    %c0_75 = arith.constant 0 : index
    %c0_76 = arith.constant 0 : index
    %184 = vector.load %arg7[%183, %c0_75, %c0_76] : memref<8x8x32xf32, #tpu.memory_space<vmem>>, vector<1x8x32xf32>
    %185 = vector.shape_cast %184 : vector<1x8x32xf32> to vector<8x32xf32>
    %186 = arith.addf %178, %185 : vector<8x32xf32>
    %187 = math.tanh %186 : vector<8x32xf32>
    %188 = arith.truncf %187 : vector<8x32xf32> to vector<8x32xbf16>
    %c127_i32_77 = arith.constant 127 : i32
    %189 = tpu.dynamic_rotate %172 by %c127_i32_77 dim 1 : vector<8x128xf32>, i32 -> vector<8x128xf32>
    %c1_i32_78 = arith.constant 1 : i32
    %190 = tpu.dynamic_rotate %172 by %c1_i32_78 dim 1 : vector<8x128xf32>, i32 -> vector<8x128xf32>
    %191 = arith.mulf %3, %189 : vector<8x128xf32>
    %192 = arith.mulf %4, %190 : vector<8x128xf32>
    %193 = arith.addf %191, %192 : vector<8x128xf32>
    %194 = arith.mulf %5, %172 : vector<8x128xf32>
    %195 = arith.addf %193, %194 : vector<8x128xf32>
    %196 = arith.addf %172, %195 : vector<8x128xf32>
    %cst_79 = arith.constant dense<0.000000e+00> : vector<8x128xf32>
    %197 = tpu.matmul %188, %1, %cst_79 {dimension_numbers = #tpu.dot_dimension_numbers<[1], [0], [0], [1], [0, 0, 1, 1], [], []>} : vector<8x32xbf16>, vector<32x128xbf16>, vector<8x128xf32> -> vector<8x128xf32>
    %198 = arith.addf %196, %197 : vector<8x128xf32>
    %199 = arith.addf %198, %8 : vector<8x128xf32>
    %200 = arith.addf %178, %11 : vector<8x32xf32>
    %cst_80 = arith.constant dense<0.000000e+00> : vector<8x32xf32>
    %201 = tpu.matmul %188, %2, %cst_80 {dimension_numbers = #tpu.dot_dimension_numbers<[1], [0], [0], [1], [0, 0, 1, 1], [], []>} : vector<8x32xbf16>, vector<32x32xbf16>, vector<8x32xf32> -> vector<8x32xf32>
    %202 = arith.addf %200, %201 : vector<8x32xf32>
    %203 = arith.truncf %195 : vector<8x128xf32> to vector<8x128xbf16>
    %cst_81 = arith.constant dense<0.000000e+00> : vector<8x32xf32>
    %204 = tpu.matmul %203, %0, %cst_81 {dimension_numbers = #tpu.dot_dimension_numbers<[1], [0], [0], [1], [0, 0, 1, 1], [], []>} : vector<8x128xbf16>, vector<128x32xbf16>, vector<8x32xf32> -> vector<8x32xf32>
    %205 = arith.addf %202, %204 : vector<8x32xf32>
    %c7_i32 = arith.constant 7 : i32
    %206 = arith.index_cast %c7_i32 : i32 to index
    %c0_82 = arith.constant 0 : index
    %c0_83 = arith.constant 0 : index
    %207 = vector.load %arg13[%206, %c0_82, %c0_83] : memref<8x8x128xf32, #tpu.memory_space<vmem>>, vector<1x8x128xf32>
    %208 = vector.shape_cast %207 : vector<1x8x128xf32> to vector<8x128xf32>
    %209 = vector.shape_cast %199 : vector<8x128xf32> to vector<1x8x128xf32>
    tpu.vector_store %arg13[%206, %c0_82, %c0_83], %209 {strides = array<i32>} : memref<8x8x128xf32, #tpu.memory_space<vmem>>, vector<1x8x128xf32>,
    %210 = arith.index_cast %c7_i32 : i32 to index
    %c0_84 = arith.constant 0 : index
    %c0_85 = arith.constant 0 : index
    %211 = vector.load %arg7[%210, %c0_84, %c0_85] : memref<8x8x32xf32, #tpu.memory_space<vmem>>, vector<1x8x32xf32>
    %212 = vector.shape_cast %211 : vector<1x8x32xf32> to vector<8x32xf32>
    %213 = arith.addf %205, %212 : vector<8x32xf32>
    %214 = math.tanh %213 : vector<8x32xf32>
    %215 = arith.truncf %214 : vector<8x32xf32> to vector<8x32xbf16>
    %c127_i32_86 = arith.constant 127 : i32
    %216 = tpu.dynamic_rotate %199 by %c127_i32_86 dim 1 : vector<8x128xf32>, i32 -> vector<8x128xf32>
    %c1_i32_87 = arith.constant 1 : i32
    %217 = tpu.dynamic_rotate %199 by %c1_i32_87 dim 1 : vector<8x128xf32>, i32 -> vector<8x128xf32>
    %218 = arith.mulf %3, %216 : vector<8x128xf32>
    %219 = arith.mulf %4, %217 : vector<8x128xf32>
    %220 = arith.addf %218, %219 : vector<8x128xf32>
    %221 = arith.mulf %5, %199 : vector<8x128xf32>
    %222 = arith.addf %220, %221 : vector<8x128xf32>
    %223 = arith.addf %199, %222 : vector<8x128xf32>
    %cst_88 = arith.constant dense<0.000000e+00> : vector<8x128xf32>
    %224 = tpu.matmul %215, %1, %cst_88 {dimension_numbers = #tpu.dot_dimension_numbers<[1], [0], [0], [1], [0, 0, 1, 1], [], []>} : vector<8x32xbf16>, vector<32x128xbf16>, vector<8x128xf32> -> vector<8x128xf32>
    %225 = arith.addf %223, %224 : vector<8x128xf32>
    %226 = arith.addf %225, %8 : vector<8x128xf32>
    %227 = arith.addf %205, %11 : vector<8x32xf32>
    %cst_89 = arith.constant dense<0.000000e+00> : vector<8x32xf32>
    %228 = tpu.matmul %215, %2, %cst_89 {dimension_numbers = #tpu.dot_dimension_numbers<[1], [0], [0], [1], [0, 0, 1, 1], [], []>} : vector<8x32xbf16>, vector<32x32xbf16>, vector<8x32xf32> -> vector<8x32xf32>
    %229 = arith.addf %227, %228 : vector<8x32xf32>
    %230 = arith.truncf %222 : vector<8x128xf32> to vector<8x128xbf16>
    %cst_90 = arith.constant dense<0.000000e+00> : vector<8x32xf32>
    %231 = tpu.matmul %230, %0, %cst_90 {dimension_numbers = #tpu.dot_dimension_numbers<[1], [0], [0], [1], [0, 0, 1, 1], [], []>} : vector<8x128xbf16>, vector<128x32xbf16>, vector<8x32xf32> -> vector<8x32xf32>
    %232 = arith.addf %229, %231 : vector<8x32xf32>
    %c8_i32 = arith.constant 8 : i32
    %c0_91 = arith.constant 0 : index
    %c0_92 = arith.constant 0 : index
    %233 = vector.load %arg14[%c0_91, %c0_92] : memref<8x128xf32, #tpu.memory_space<vmem>>, vector<8x128xf32>
    tpu.vector_store %arg14[%c0_91, %c0_92], %226 {strides = array<i32>} : memref<8x128xf32, #tpu.memory_space<vmem>>, vector<8x128xf32>,
    %c0_93 = arith.constant 0 : index
    %c0_94 = arith.constant 0 : index
    %234 = vector.load %arg15[%c0_93, %c0_94] : memref<8x32xf32, #tpu.memory_space<vmem>>, vector<8x32xf32>
    tpu.vector_store %arg15[%c0_93, %c0_94], %232 {strides = array<i32>} : memref<8x32xf32, #tpu.memory_space<vmem>>, vector<8x32xf32>,
    return
  }
  func.func @transform_0(%arg0: i32, %arg1: i32) -> (i32, i32) {
    %c0_i32 = arith.constant 0 : i32
    %c0_i32_0 = arith.constant 0 : i32
    return %arg0, %c0_i32 : i32, i32
  }
  func.func @transform_1(%arg0: i32, %arg1: i32) -> (i32, i32) {
    %c0_i32 = arith.constant 0 : i32
    %c0_i32_0 = arith.constant 0 : i32
    return %arg0, %c0_i32 : i32, i32
  }
  func.func @transform_2(%arg0: i32, %arg1: i32) -> (i32, i32) {
    %c0_i32 = arith.constant 0 : i32
    %c0_i32_0 = arith.constant 0 : i32
    return %arg0, %c0_i32 : i32, i32
  }
  func.func @transform_3(%arg0: i32, %arg1: i32) -> (i32, i32) {
    %c0_i32 = arith.constant 0 : i32
    %c0_i32_0 = arith.constant 0 : i32
    return %arg0, %c0_i32 : i32, i32
  }
  func.func @transform_4(%arg0: i32, %arg1: i32) -> (i32, i32) {
    %c0_i32 = arith.constant 0 : i32
    %c0_i32_0 = arith.constant 0 : i32
    return %arg0, %c0_i32 : i32, i32
  }
  func.func @transform_5(%arg0: i32, %arg1: i32) -> (i32, i32, i32) {
    %c0_i32 = arith.constant 0 : i32
    %c0_i32_0 = arith.constant 0 : i32
    return %arg1, %arg0, %c0_i32 : i32, i32, i32
  }
  func.func @transform_6(%arg0: i32, %arg1: i32) -> (i32, i32) {
    %c0_i32 = arith.constant 0 : i32
    %c0_i32_0 = arith.constant 0 : i32
    %c0_i32_1 = arith.constant 0 : i32
    return %c0_i32, %c0_i32_0 : i32, i32
  }
  func.func @transform_7(%arg0: i32, %arg1: i32) -> (i32, i32) {
    %c0_i32 = arith.constant 0 : i32
    %c0_i32_0 = arith.constant 0 : i32
    %c0_i32_1 = arith.constant 0 : i32
    return %c0_i32, %c0_i32_0 : i32, i32
  }
  func.func @transform_8(%arg0: i32, %arg1: i32) -> (i32, i32) {
    %c0_i32 = arith.constant 0 : i32
    %c0_i32_0 = arith.constant 0 : i32
    %c0_i32_1 = arith.constant 0 : i32
    return %c0_i32, %c0_i32_0 : i32, i32
  }
  func.func @transform_9(%arg0: i32, %arg1: i32) -> (i32, i32) {
    %c0_i32 = arith.constant 0 : i32
    %c0_i32_0 = arith.constant 0 : i32
    %c0_i32_1 = arith.constant 0 : i32
    return %c0_i32, %c0_i32_0 : i32, i32
  }
  func.func @transform_10(%arg0: i32, %arg1: i32) -> (i32, i32) {
    %c0_i32 = arith.constant 0 : i32
    %c0_i32_0 = arith.constant 0 : i32
    %c0_i32_1 = arith.constant 0 : i32
    return %c0_i32, %c0_i32_0 : i32, i32
  }
  func.func @transform_11(%arg0: i32, %arg1: i32) -> (i32, i32, i32) {
    %c0_i32 = arith.constant 0 : i32
    %c0_i32_0 = arith.constant 0 : i32
    return %arg1, %arg0, %c0_i32 : i32, i32, i32
  }
}

</mosaic_0001>

<llo_original>
// kernel: neural_advdiff_simulate.1
$region0: #{neural_advdiff_simulate.1}
  #allocation0 [shape = 'u32[]', space=smem, size = 0x4, offset = 0x4, fixed_abs, tag = 'smem constant byte address 0x4 - core index']
  #allocation1 [shape = 'u32[72,128]{1,0:T(1,128)}', space=vmem, size = 0x9000, scoped, tag = 'internal scratch']
  #allocation2 [shape = 'f32[8,128]{1,0:T(8,128)}', space=vmem, size = 0x1000, scoped, tag = 'scratch operand']
  #allocation3 [shape = 'f32[8,32]{1,0:T(8,128)}', space=vmem, size = 0x1000, scoped, tag = 'scratch operand']
  %s0 = inlined_call_operand.vmem [shape: f32[16,128], index: 0, kind: input, shape index: {}]
  %s1 = inlined_call_operand.vmem [shape: f32[16,32], index: 1, kind: input, shape index: {}]
  %s2 = inlined_call_operand.vmem [shape: f32[16,128], index: 2, kind: input, shape index: {}]
  %s3 = inlined_call_operand.vmem [shape: f32[16,128], index: 3, kind: input, shape index: {}]
  %s4 = inlined_call_operand.vmem [shape: f32[16,128], index: 4, kind: input, shape index: {}]
  %s5 = inlined_call_operand.vmem [shape: f32[8,16,32], index: 5, kind: input, shape index: {}]
  %s6 = inlined_call_operand.vmem [shape: bf16[128,32], index: 6, kind: input, shape index: {}]
  %s7 = inlined_call_operand.vmem [shape: bf16[32,128], index: 7, kind: input, shape index: {}]
  %s8 = inlined_call_operand.vmem [shape: bf16[32,32], index: 8, kind: input, shape index: {}]
  %s9 = inlined_call_operand.vmem [shape: f32[1,128], index: 9, kind: input, shape index: {}]
  %s10 = inlined_call_operand.vmem [shape: f32[1,32], index: 10, kind: input, shape index: {}]
  %s11 = inlined_call_operand.vmem [shape: f32[8,16,128], index: 11, kind: output, shape index: {}]
  %s12 = sld [smem:[#allocation0]]
  $region153: #{neural_advdiff_simulate.1} parent=0
    _
  %s14 = ssub.s32 1, %s12
  %s15 = scalar_select 0, %s14, %s12
  $region1: #{neural_advdiff_simulate.1} parent=0
    #allocation4 [shape = 'u8[65536]{0}', space=vmem, size = 0x10000, scoped, tag = 'input window, operand 5']
    #allocation5 [shape = 'u8[65536]{0}', space=vmem, size = 0x10000, scoped, tag = 'output window, operand 0']
    loop: start=0, step=1, limit=4
    $region2: #{neural_advdiff_simulate.1} parent=1 // loop_pre_header
      _
    $region3: #{neural_advdiff_simulate.1} parent=1 // loop_header
      %s17 = sphi 0, %s21
      %p18 = scmp.ge.s32.totalorder %s17, 4
      %s24 = sphi 0, %s36
      %s25 = sphi 0, %s32
      %s26 = sphi 0, %s24
      %s27 = sphi 0, %s25
      %s28 = sphi 0, %s26
      %s29 = sphi 0, %s27
      %s39 = sphi 0, %s41
      %s42 = sphi 0, %s39
      %s43 = sphi 0, %s42
      %s59 = sphi 0, %s43
      %s65 = sphi 0, %s67
      %s68 = sphi 0, %s65
      %s69 = sphi 0, %s68
      %s85 = sphi 0, %s69
      %s91 = sphi 0, %s93
      %s94 = sphi 0, %s91
      %s95 = sphi 0, %s94
      %s111 = sphi 0, %s95
      %s117 = sphi 0, %s119
      %s120 = sphi 0, %s117
      %s121 = sphi 0, %s120
      %s137 = sphi 0, %s121
      %s143 = sphi 0, %s145
      %s146 = sphi 0, %s143
      %s147 = sphi 0, %s146
      %s163 = sphi 0, %s147
      %s171 = sphi 0, %s173
      %s174 = sphi 0, %s171
      %s175 = sphi 0, %s174
      %s191 = sphi 0, %s175
      %s195 = sphi 0, %s195
      %s197 = sphi 0, %s195
      %s198 = sphi 0, %s197
      %s212 = sphi 0, %s198
      %s216 = sphi 0, %s216
      %s218 = sphi 0, %s216
      %s219 = sphi 0, %s218
      %s233 = sphi 0, %s219
      %s237 = sphi 0, %s237
      %s239 = sphi 0, %s237
      %s240 = sphi 0, %s239
      %s254 = sphi 0, %s240
      %s258 = sphi 0, %s258
      %s260 = sphi 0, %s258
      %s261 = sphi 0, %s260
      %s275 = sphi 0, %s261
      %s279 = sphi 0, %s279
      %s281 = sphi 0, %s279
      %s282 = sphi 0, %s281
      %s296 = sphi 0, %s282
      %s304 = sphi 0, %s306
      %s307 = sphi 0, %s304
      %s308 = sphi 0, %s307
      %s324 = sphi 0, %s308
    $region4: #{neural_advdiff_simulate.1} parent=1 // loop_header_branch
      %20 = sbr.rel (%p18) target = $region8
    $region5: #{neural_advdiff_simulate.1} parent=1 // loop_body
      %s22 = ssub.s32 %s17, 1
      %s23 = ssub.s32 %s17, 2
      %s30 = sadd.s32 1, %s25
      %p31 = scmp.ge.s32.totalorder %s30, 1
      %s32 = scalar_select %p31, 0, %s30
      %s33 = sadd.s32 1, %s24
      %s34 = scalar_select %p31, %s33, %s24
      %p35 = scmp.ge.s32.totalorder %s34, 2
      %s36 = scalar_select %p35, 0, %s34
      %s37 = ssub.s32 %s24, %s36
      %p38 = scmp.eq.s32.totalorder %s37, 0
      %s40 = sadd.s32 %s39, 1
      %s41 = scalar_select %p38, %s39, %s40
      %p44 = pneg %p38
      %p45 = scmp.eq.s32.totalorder %s17, 1
      %p46 = por %p44, %p45
      %p47 = scmp.ne.s32.totalorder %s39, %s42
      %p48 = scmp.eq.s32.totalorder %s17, 0
      %p49 = por %p47, %p48
      %p50 = scmp.ne.s32.totalorder %s39, %s42
      %p51 = scmp.eq.s32.totalorder %s22, 1
      %p52 = por %p50, %p51
      %p53 = scmp.ne.s32.totalorder %s42, %s43
      %p54 = scmp.eq.s32.totalorder %s22, 0
      %p55 = por %p53, %p54
      %p56 = scmp.ne.s32.totalorder %s42, %s43
      %p57 = scmp.eq.s32.totalorder %s23, 1
      %p58 = por %p56, %p57
      %p60 = scmp.ne.s32.totalorder %s43, %s59
      %p61 = scmp.eq.s32.totalorder %s23, 0
      %p62 = por %p60, %p61
      %s63 = ssub.s32 %s24, %s36
      %p64 = scmp.eq.s32.totalorder %s63, 0
      %s66 = sadd.s32 %s65, 1
      %s67 = scalar_select %p64, %s65, %s66
      %p70 = pneg %p64
      %p71 = scmp.eq.s32.totalorder %s17, 1
      %p72 = por %p70, %p71
      %p73 = scmp.ne.s32.totalorder %s65, %s68
      %p74 = scmp.eq.s32.totalorder %s17, 0
      %p75 = por %p73, %p74
      %p76 = scmp.ne.s32.totalorder %s65, %s68
      %p77 = scmp.eq.s32.totalorder %s22, 1
      %p78 = por %p76, %p77
      %p79 = scmp.ne.s32.totalorder %s68, %s69
      %p80 = scmp.eq.s32.totalorder %s22, 0
      %p81 = por %p79, %p80
      %p82 = scmp.ne.s32.totalorder %s68, %s69
      %p83 = scmp.eq.s32.totalorder %s23, 1
      %p84 = por %p82, %p83
      %p86 = scmp.ne.s32.totalorder %s69, %s85
      %p87 = scmp.eq.s32.totalorder %s23, 0
      %p88 = por %p86, %p87
      %s89 = ssub.s32 %s24, %s36
      %p90 = scmp.eq.s32.totalorder %s89, 0
      %s92 = sadd.s32 %s91, 1
      %s93 = scalar_select %p90, %s91, %s92
      %p96 = pneg %p90
      %p97 = scmp.eq.s32.totalorder %s17, 1
      %p98 = por %p96, %p97
      %p99 = scmp.ne.s32.totalorder %s91, %s94
      %p100 = scmp.eq.s32.totalorder %s17, 0
      %p101 = por %p99, %p100
      %p102 = scmp.ne.s32.totalorder %s91, %s94
      %p103 = scmp.eq.s32.totalorder %s22, 1
      %p104 = por %p102, %p103
      %p105 = scmp.ne.s32.totalorder %s94, %s95
      %p106 = scmp.eq.s32.totalorder %s22, 0
      %p107 = por %p105, %p106
      %p108 = scmp.ne.s32.totalorder %s94, %s95
      %p109 = scmp.eq.s32.totalorder %s23, 1
      %p110 = por %p108, %p109
      %p112 = scmp.ne.s32.totalorder %s95, %s111
      %p113 = scmp.eq.s32.totalorder %s23, 0
      %p114 = por %p112, %p113
      %s115 = ssub.s32 %s24, %s36
      %p116 = scmp.eq.s32.totalorder %s115, 0
      %s118 = sadd.s32 %s117, 1
      %s119 = scalar_select %p116, %s117, %s118
      %p122 = pneg %p116
      %p123 = scmp.eq.s32.totalorder %s17, 1
      %p124 = por %p122, %p123
      %p125 = scmp.ne.s32.totalorder %s117, %s120
      %p126 = scmp.eq.s32.totalorder %s17, 0
      %p127 = por %p125, %p126
      %p128 = scmp.ne.s32.totalorder %s117, %s120
      %p129 = scmp.eq.s32.totalorder %s22, 1
      %p130 = por %p128, %p129
      %p131 = scmp.ne.s32.totalorder %s120, %s121
      %p132 = scmp.eq.s32.totalorder %s22, 0
      %p133 = por %p131, %p132
      %p134 = scmp.ne.s32.totalorder %s120, %s121
      %p135 = scmp.eq.s32.totalorder %s23, 1
      %p136 = por %p134, %p135
      %p138 = scmp.ne.s32.totalorder %s121, %s137
      %p139 = scmp.eq.s32.totalorder %s23, 0
      %p140 = por %p138, %p139
      %s141 = ssub.s32 %s24, %s36
      %p142 = scmp.eq.s32.totalorder %s141, 0
      %s144 = sadd.s32 %s143, 1
      %s145 = scalar_select %p142, %s143, %s144
      %p148 = pneg %p142
      %p149 = scmp.eq.s32.totalorder %s17, 1
      %p150 = por %p148, %p149
      %p151 = scmp.ne.s32.totalorder %s143, %s146
      %p152 = scmp.eq.s32.totalorder %s17, 0
      %p153 = por %p151, %p152
      %p154 = scmp.ne.s32.totalorder %s143, %s146
      %p155 = scmp.eq.s32.totalorder %s22, 1
      %p156 = por %p154, %p155
      %p157 = scmp.ne.s32.totalorder %s146, %s147
      %p158 = scmp.eq.s32.totalorder %s22, 0
      %p159 = por %p157, %p158
      %p160 = scmp.ne.s32.totalorder %s146, %s147
      %p161 = scmp.eq.s32.totalorder %s23, 1
      %p162 = por %p160, %p161
      %p164 = scmp.ne.s32.totalorder %s147, %s163
      %p165 = scmp.eq.s32.totalorder %s23, 0
      %p166 = por %p164, %p165
      %s167 = ssub.s32 %s25, %s32
      %s168 = ssub.s32 %s24, %s36
      %s169 = sor.u32 %s167, %s168
      %p170 = scmp.eq.s32.totalorder %s169, 0
      %s172 = sadd.s32 %s171, 1
      %s173 = scalar_select %p170, %s171, %s172
      %p176 = pneg %p170
      %p177 = scmp.eq.s32.totalorder %s17, 1
      %p178 = por %p176, %p177
      %p179 = scmp.ne.s32.totalorder %s171, %s174
      %p180 = scmp.eq.s32.totalorder %s17, 0
      %p181 = por %p179, %p180
      %p182 = scmp.ne.s32.totalorder %s171, %s174
      %p183 = scmp.eq.s32.totalorder %s22, 1
      %p184 = por %p182, %p183
      %p185 = scmp.ne.s32.totalorder %s174, %s175
      %p186 = scmp.eq.s32.totalorder %s22, 0
      %p187 = por %p185, %p186
      %p188 = scmp.ne.s32.totalorder %s174, %s175
      %p189 = scmp.eq.s32.totalorder %s23, 1
      %p190 = por %p188, %p189
      %p192 = scmp.ne.s32.totalorder %s175, %s191
      %p193 = scmp.eq.s32.totalorder %s23, 0
      %p194 = por %p192, %p193
      %s196 = sadd.s32 %s195, 1
      %p199 = scmp.eq.s32.totalorder %s17, 1
      %p200 = scmp.ne.s32.totalorder %s195, %s197
      %p201 = scmp.eq.s32.totalorder %s17, 0
      %p202 = por %p200, %p201
      %p203 = scmp.ne.s32.totalorder %s195, %s197
      %p204 = scmp.eq.s32.totalorder %s22, 1
      %p205 = por %p203, %p204
      %p206 = scmp.ne.s32.totalorder %s197, %s198
      %p207 = scmp.eq.s32.totalorder %s22, 0
      %p208 = por %p206, %p207
      %p209 = scmp.ne.s32.totalorder %s197, %s198
      %p210 = scmp.eq.s32.totalorder %s23, 1
      %p211 = por %p209, %p210
      %p213 = scmp.ne.s32.totalorder %s198, %s212
      %p214 = scmp.eq.s32.totalorder %s23, 0
      %p215 = por %p213, %p214
      %s217 = sadd.s32 %s216, 1
      %p220 = scmp.eq.s32.totalorder %s17, 1
      %p221 = scmp.ne.s32.totalorder %s216, %s218
      %p222 = scmp.eq.s32.totalorder %s17, 0
      %p223 = por %p221, %p222
      %p224 = scmp.ne.s32.totalorder %s216, %s218
      %p225 = scmp.eq.s32.totalorder %s22, 1
      %p226 = por %p224, %p225
      %p227 = scmp.ne.s32.totalorder %s218, %s219
      %p228 = scmp.eq.s32.totalorder %s22, 0
      %p229 = por %p227, %p228
      %p230 = scmp.ne.s32.totalorder %s218, %s219
      %p231 = scmp.eq.s32.totalorder %s23, 1
      %p232 = por %p230, %p231
      %p234 = scmp.ne.s32.totalorder %s219, %s233
      %p235 = scmp.eq.s32.totalorder %s23, 0
      %p236 = por %p234, %p235
      %s238 = sadd.s32 %s237, 1
      %p241 = scmp.eq.s32.totalorder %s17, 1
      %p242 = scmp.ne.s32.totalorder %s237, %s239
      %p243 = scmp.eq.s32.totalorder %s17, 0
      %p244 = por %p242, %p243
      %p245 = scmp.ne.s32.totalorder %s237, %s239
      %p246 = scmp.eq.s32.totalorder %s22, 1
      %p247 = por %p245, %p246
      %p248 = scmp.ne.s32.totalorder %s239, %s240
      %p249 = scmp.eq.s32.totalorder %s22, 0
      %p250 = por %p248, %p249
      %p251 = scmp.ne.s32.totalorder %s239, %s240
      %p252 = scmp.eq.s32.totalorder %s23, 1
      %p253 = por %p251, %p252
      %p255 = scmp.ne.s32.totalorder %s240, %s254
      %p256 = scmp.eq.s32.totalorder %s23, 0
      %p257 = por %p255, %p256
      %s259 = sadd.s32 %s258, 1
      %p262 = scmp.eq.s32.totalorder %s17, 1
      %p263 = scmp.ne.s32.totalorder %s258, %s260
      %p264 = scmp.eq.s32.totalorder %s17, 0
      %p265 = por %p263, %p264
      %p266 = scmp.ne.s32.totalorder %s258, %s260
      %p267 = scmp.eq.s32.totalorder %s22, 1
      %p268 = por %p266, %p267
      %p269 = scmp.ne.s32.totalorder %s260, %s261
      %p270 = scmp.eq.s32.totalorder %s22, 0
      %p271 = por %p269, %p270
      %p272 = scmp.ne.s32.totalorder %s260, %s261
      %p273 = scmp.eq.s32.totalorder %s23, 1
      %p274 = por %p272, %p273
      %p276 = scmp.ne.s32.totalorder %s261, %s275
      %p277 = scmp.eq.s32.totalorder %s23, 0
      %p278 = por %p276, %p277
      %s280 = sadd.s32 %s279, 1
      %p283 = scmp.eq.s32.totalorder %s17, 1
      %p284 = scmp.ne.s32.totalorder %s279, %s281
      %p285 = scmp.eq.s32.totalorder %s17, 0
      %p286 = por %p284, %p285
      %p287 = scmp.ne.s32.totalorder %s279, %s281
      %p288 = scmp.eq.s32.totalorder %s22, 1
      %p289 = por %p287, %p288
      %p290 = scmp.ne.s32.totalorder %s281, %s282
      %p291 = scmp.eq.s32.totalorder %s22, 0
      %p292 = por %p290, %p291
      %p293 = scmp.ne.s32.totalorder %s281, %s282
      %p294 = scmp.eq.s32.totalorder %s23, 1
      %p295 = por %p293, %p294
      %p297 = scmp.ne.s32.totalorder %s282, %s296
      %p298 = scmp.eq.s32.totalorder %s23, 0
      %p299 = por %p297, %p298
      %s300 = ssub.s32 %s25, %s32
      %s301 = ssub.s32 %s24, %s36
      %s302 = sor.u32 %s300, %s301
      %p303 = scmp.eq.s32.totalorder %s302, 0
      %s305 = sadd.s32 %s304, 1
      %s306 = scalar_select %p303, %s304, %s305
      %p309 = pneg %p303
      %p310 = scmp.eq.s32.totalorder %s17, 1
      %p311 = por %p309, %p310
      %p312 = scmp.ne.s32.totalorder %s304, %s307
      %p313 = scmp.eq.s32.totalorder %s17, 0
      %p314 = por %p312, %p313
      %p315 = scmp.ne.s32.totalorder %s304, %s307
      %p316 = scmp.eq.s32.totalorder %s22, 1
      %p317 = por %p315, %p316
      %p318 = scmp.ne.s32.totalorder %s307, %s308
      %p319 = scmp.eq.s32.totalorder %s22, 0
      %p320 = por %p318, %p319
      %p321 = scmp.ne.s32.totalorder %s307, %s308
      %p322 = scmp.eq.s32.totalorder %s23, 1
      %p323 = por %p321, %p322
      %p325 = scmp.ne.s32.totalorder %s308, %s324
      %p326 = scmp.eq.s32.totalorder %s23, 0
      %p327 = por %p325, %p326
      %p328 = scmp.le.s32.totalorder 1, %s17
      %p329 = scmp.lt.s32.totalorder %s17, 3
      %p330 = pnand %p328, %p329
      %p331 = pneg %p330
      // Predicated region
      $region9: #{neural_advdiff_simulate.1} parent=5 // pred_check
        _
      $region10: #{neural_advdiff_simulate.1} parent=5 // pred_check_branch
        %333 = sbr.rel (%p330) target = $region12
      $region11: #{neural_advdiff_simulate.1} parent=5 // pred_region
        %s334 = ssub.s32 %s17, 1
        // Predicated region
        $region13: #{neural_advdiff_simulate.1} parent=11 // pred_check
          %p335 = pneg %p208
        $region14: #{neural_advdiff_simulate.1} parent=11 // pred_check_branch
          %337 = sbr.rel (%p335) target = $region16
        $region15: #{neural_advdiff_simulate.1} parent=11 // pred_region
          _
        $region16: #{neural_advdiff_simulate.1} parent=11 // pred_fallthru
          _
        // Predicated region
        $region17: #{neural_advdiff_simulate.1} parent=11 // pred_check
          %p338 = pneg %p229
        $region18: #{neural_advdiff_simulate.1} parent=11 // pred_check_branch
          %340 = sbr.rel (%p338) target = $region20
        $region19: #{neural_advdiff_simulate.1} parent=11 // pred_region
          _
        $region20: #{neural_advdiff_simulate.1} parent=11 // pred_fallthru
          _
        // Predicated region
        $region21: #{neural_advdiff_simulate.1} parent=11 // pred_check
          %p341 = pneg %p250
        $region22: #{neural_advdiff_simulate.1} parent=11 // pred_check_branch
          %343 = sbr.rel (%p341) target = $region24
        $region23: #{neural_advdiff_simulate.1} parent=11 // pred_region
          _
        $region24: #{neural_advdiff_simulate.1} parent=11 // pred_fallthru
          _
        // Predicated region
        $region25: #{neural_advdiff_simulate.1} parent=11 // pred_check
          %p344 = pneg %p271
        $region26: #{neural_advdiff_simulate.1} parent=11 // pred_check_branch
          %346 = sbr.rel (%p344) target = $region28
        $region27: #{neural_advdiff_simulate.1} parent=11 // pred_region
          _
        $region28: #{neural_advdiff_simulate.1} parent=11 // pred_fallthru
          _
        // Predicated region
        $region29: #{neural_advdiff_simulate.1} parent=11 // pred_check
          %p347 = pneg %p292
        $region30: #{neural_advdiff_simulate.1} parent=11 // pred_check_branch
          %349 = sbr.rel (%p347) target = $region32
        $region31: #{neural_advdiff_simulate.1} parent=11 // pred_region
          _
        $region32: #{neural_advdiff_simulate.1} parent=11 // pred_fallthru
          _
      $region12: #{neural_advdiff_simulate.1} parent=5 // pred_fallthru
        _
      %p350 = scmp.lt.s32.totalorder %s17, 2
      // Predicated region
      $region33: #{neural_advdiff_simulate.1} parent=5 // pred_check
        %p351 = pneg %p350
      $region34: #{neural_advdiff_simulate.1} parent=5 // pred_check_branch
        %353 = sbr.rel (%p351) target = $region36
      $region35: #{neural_advdiff_simulate.1} parent=5 // pred_region
        // Predicated region
        $region37: #{neural_advdiff_simulate.1} parent=35 // pred_check
          %p354 = pneg %p49
        $region38: #{neural_advdiff_simulate.1} parent=35 // pred_check_branch
          %356 = sbr.rel (%p354) target = $region40
        $region39: #{neural_advdiff_simulate.1} parent=35 // pred_region
          %p357 = scmp.lt.s32.totalorder %s24, 1
          %s358 = scalar_select %p357, %s24, 1
          %s359 = smul.addr %s358, 8
          %s360 = scalar_lea.vmem %s0, %s359
        $region40: #{neural_advdiff_simulate.1} parent=35 // pred_fallthru
          _
        // Predicated region
        $region41: #{neural_advdiff_simulate.1} parent=35 // pred_check
          %p361 = pneg %p75
        $region42: #{neural_advdiff_simulate.1} parent=35 // pred_check_branch
          %363 = sbr.rel (%p361) target = $region44
        $region43: #{neural_advdiff_simulate.1} parent=35 // pred_region
          %p364 = scmp.lt.s32.totalorder %s24, 1
          %s365 = scalar_select %p364, %s24, 1
          %s366 = smul.addr %s365, 8
          %s367 = scalar_lea.vmem %s1, %s366
        $region44: #{neural_advdiff_simulate.1} parent=35 // pred_fallthru
          _
        // Predicated region
        $region45: #{neural_advdiff_simulate.1} parent=35 // pred_check
          %p368 = pneg %p101
        $region46: #{neural_advdiff_simulate.1} parent=35 // pred_check_branch
          %370 = sbr.rel (%p368) target = $region48
        $region47: #{neural_advdiff_simulate.1} parent=35 // pred_region
          %p371 = scmp.lt.s32.totalorder %s24, 1
          %s372 = scalar_select %p371, %s24, 1
          %s373 = smul.addr %s372, 8
          %s374 = scalar_lea.vmem %s2, %s373
        $region48: #{neural_advdiff_simulate.1} parent=35 // pred_fallthru
          _
        // Predicated region
        $region49: #{neural_advdiff_simulate.1} parent=35 // pred_check
          %p375 = pneg %p127
        $region50: #{neural_advdiff_simulate.1} parent=35 // pred_check_branch
          %377 = sbr.rel (%p375) target = $region52
        $region51: #{neural_advdiff_simulate.1} parent=35 // pred_region
          %p378 = scmp.lt.s32.totalorder %s24, 1
          %s379 = scalar_select %p378, %s24, 1
          %s380 = smul.addr %s379, 8
          %s381 = scalar_lea.vmem %s3, %s380
        $region52: #{neural_advdiff_simulate.1} parent=35 // pred_fallthru
          _
        // Predicated region
        $region53: #{neural_advdiff_simulate.1} parent=35 // pred_check
          %p382 = pneg %p153
        $region54: #{neural_advdiff_simulate.1} parent=35 // pred_check_branch
          %384 = sbr.rel (%p382) target = $region56
        $region55: #{neural_advdiff_simulate.1} parent=35 // pred_region
          %p385 = scmp.lt.s32.totalorder %s24, 1
          %s386 = scalar_select %p385, %s24, 1
          %s387 = smul.addr %s386, 8
          %s388 = scalar_lea.vmem %s4, %s387
        $region56: #{neural_advdiff_simulate.1} parent=35 // pred_fallthru
          _
        // Predicated region
        $region57: #{neural_advdiff_simulate.1} parent=35 // pred_check
          %p389 = pneg %p181
        $region58: #{neural_advdiff_simulate.1} parent=35 // pred_check_branch
          %391 = sbr.rel (%p389) target = $region60
        $region59: #{neural_advdiff_simulate.1} parent=35 // pred_region
          %s392 = sand.u32 %s171, 1
          %s393 = sand.u32 %s171, 1
          %s394 = smul.addr %s393, 64
          %s395 = scalar_lea.vmem [#allocation4], %s394
          %s396 = smul.u32 8, %s25
          %s397 = smul.addr %s396, 2
          %s398 = sadd.s32 %s24, %s397
          %s399 = smul.addr %s398, 8
          %s400 = scalar_lea.vmem %s5, %s399
          // Predicated region
          $region61: #{neural_advdiff_simulate.1} parent=59 // pred_check
            _
          $region62: #{neural_advdiff_simulate.1} parent=59 // pred_check_branch
            %402 = sbr.rel (0) target = $region64
          $region63: #{neural_advdiff_simulate.1} parent=59 // pred_region
            // Predicated region
            $region65: #{neural_advdiff_simulate.1} parent=63 // pred_check
              _
            $region66: #{neural_advdiff_simulate.1} parent=63 // pred_check_branch
              %404 = sbr.rel (0) target = $region68
            $region67: #{neural_advdiff_simulate.1} parent=63 // pred_region
              // Predicated region
              $region80: #{neural_advdiff_simulate.1} parent=67 // pred_check
                _
              $region81: #{neural_advdiff_simulate.1} parent=67 // pred_check_branch
                %434 = sbr.rel (0) target = $region83
              $region82: #{neural_advdiff_simulate.1} parent=67 // pred_region
                loop: start=0, step=1, limit=1
                $region84: #{neural_advdiff_simulate.1} parent=82 // loop_pre_header
                  _
                $region85: #{neural_advdiff_simulate.1} parent=82 // loop_header
                  %s436 = sphi 0, %s440
                  %p437 = scmp.ge.s32.totalorder %s436, 1
                  %s441 = sphi %s400, %s400
                  %s442 = sphi %s395, %s395
                $region86: #{neural_advdiff_simulate.1} parent=82 // loop_header_branch
                  %439 = sbr.rel (%p437) target = $region90
                $region87: #{neural_advdiff_simulate.1} parent=82 // loop_body
                  %v443 = vld [vmem:[%s441] sm:$0xff]
                  %444 = vst [vmem:[%s442] sm:$0xff] %v443
                  %v445 = vld [vmem:[%s441 + $0x10] sm:$0xff]
                  %446 = vst [vmem:[%s442 + $0x8] sm:$0xff] %v445
                  %v447 = vld [vmem:[%s441 + $0x20] sm:$0xff]
                  %448 = vst [vmem:[%s442 + $0x10] sm:$0xff] %v447
                  %v449 = vld [vmem:[%s441 + $0x30] sm:$0xff]
                  %450 = vst [vmem:[%s442 + $0x18] sm:$0xff] %v449
                  %v451 = vld [vmem:[%s441 + $0x40] sm:$0xff]
                  %452 = vst [vmem:[%s442 + $0x20] sm:$0xff] %v451
                  %v453 = vld [vmem:[%s441 + $0x50] sm:$0xff]
                  %454 = vst [vmem:[%s442 + $0x28] sm:$0xff] %v453
                  %v455 = vld [vmem:[%s441 + $0x60] sm:$0xff]
                  %456 = vst [vmem:[%s442 + $0x30] sm:$0xff] %v455
                  %v457 = vld [vmem:[%s441 + $0x70] sm:$0xff]
                  %458 = vst [vmem:[%s442 + $0x38] sm:$0xff] %v457
                $region88: #{neural_advdiff_simulate.1} parent=82 // loop_footer
                  %s440 = sadd.s32 1, %s436
                $region89: #{neural_advdiff_simulate.1} parent=82 // loop_footer_branch
                  %435 = sbr.rel target = $region85
                $region90: #{neural_advdiff_simulate.1} parent=82 // loop_exit
                  _
              $region83: #{neural_advdiff_simulate.1} parent=67 // pred_fallthru
                _
              // Predicated region
              $region91: #{neural_advdiff_simulate.1} parent=67 // pred_check
                _
              $region92: #{neural_advdiff_simulate.1} parent=67 // pred_check_branch
                %460 = sbr.rel target = $region94
              $region93: #{neural_advdiff_simulate.1} parent=67 // pred_region
                _
              $region94: #{neural_advdiff_simulate.1} parent=67 // pred_fallthru
                _
            $region68: #{neural_advdiff_simulate.1} parent=63 // pred_fallthru
              _
            // Predicated region
            $region69: #{neural_advdiff_simulate.1} parent=63 // pred_check
              _
            $region70: #{neural_advdiff_simulate.1} parent=63 // pred_check_branch
              %406 = sbr.rel target = $region72
            $region71: #{neural_advdiff_simulate.1} parent=63 // pred_region
              %s408 = ssub.s32 256, 1
              loop: start=0, step=1, limit=1
              $region73: #{neural_advdiff_simulate.1} parent=71 // loop_pre_header
                _
              $region74: #{neural_advdiff_simulate.1} parent=71 // loop_header
                %s410 = sphi 0, %s414
                %p411 = scmp.ge.s32.totalorder %s410, 1
                %s415 = sphi %s400, %s400
                %s416 = sphi %s395, %s395
              $region75: #{neural_advdiff_simulate.1} parent=71 // loop_header_branch
                %413 = sbr.rel (%p411) target = $region79
              $region76: #{neural_advdiff_simulate.1} parent=71 // loop_body
                %v417 = vld [vmem:[%s415] sm:%s408]
                %418 = vst [vmem:[%s416] sm:%s408] %v417
                %v419 = vld [vmem:[%s415 + $0x10] sm:%s408]
                %420 = vst [vmem:[%s416 + $0x8] sm:%s408] %v419
                %v421 = vld [vmem:[%s415 + $0x20] sm:%s408]
                %422 = vst [vmem:[%s416 + $0x10] sm:%s408] %v421
                %v423 = vld [vmem:[%s415 + $0x30] sm:%s408]
                %424 = vst [vmem:[%s416 + $0x18] sm:%s408] %v423
                %v425 = vld [vmem:[%s415 + $0x40] sm:%s408]
                %426 = vst [vmem:[%s416 + $0x20] sm:%s408] %v425
                %v427 = vld [vmem:[%s415 + $0x50] sm:%s408]
                %428 = vst [vmem:[%s416 + $0x28] sm:%s408] %v427
                %v429 = vld [vmem:[%s415 + $0x60] sm:%s408]
                %430 = vst [vmem:[%s416 + $0x30] sm:%s408] %v429
                %v431 = vld [vmem:[%s415 + $0x70] sm:%s408]
                %432 = vst [vmem:[%s416 + $0x38] sm:%s408] %v431
              $region77: #{neural_advdiff_simulate.1} parent=71 // loop_footer
                %s414 = sadd.s32 1, %s410
              $region78: #{neural_advdiff_simulate.1} parent=71 // loop_footer_branch
                %409 = sbr.rel target = $region74
              $region79: #{neural_advdiff_simulate.1} parent=71 // loop_exit
                _
            $region72: #{neural_advdiff_simulate.1} parent=63 // pred_fallthru
              _
          $region64: #{neural_advdiff_simulate.1} parent=59 // pred_fallthru
            _
          %461 = vnop
        $region60: #{neural_advdiff_simulate.1} parent=35 // pred_fallthru
          _
      $region36: #{neural_advdiff_simulate.1} parent=5 // pred_fallthru
        _
      %p462 = scmp.le.s32.totalorder 1, %s17
      %p463 = scmp.lt.s32.totalorder %s17, 3
      %p464 = pnand %p462, %p463
      %p465 = pneg %p464
      // Predicated region
      $region95: #{neural_advdiff_simulate.1} parent=5 // pred_check
        _
      $region96: #{neural_advdiff_simulate.1} parent=5 // pred_check_branch
        %467 = sbr.rel (%p464) target = $region98
      $region97: #{neural_advdiff_simulate.1} parent=5 // pred_region
        %s468 = ssub.s32 %s17, 1
        %s469 = sand.u32 %s174, 1
        %s470 = sand.u32 %s174, 1
        %s471 = smul.addr %s470, 64
        %s472 = scalar_lea.vmem [#allocation4], %s471
        // Predicated region
        $region99: #{neural_advdiff_simulate.1} parent=97 // pred_check
          %p473 = pneg %p187
        $region100: #{neural_advdiff_simulate.1} parent=97 // pred_check_branch
          %475 = sbr.rel (%p473) target = $region102
        $region101: #{neural_advdiff_simulate.1} parent=97 // pred_region
          _
        $region102: #{neural_advdiff_simulate.1} parent=97 // pred_fallthru
          _
        %p476 = scmp.lt.s32.totalorder %s26, 1
        %s477 = scalar_select %p476, %s26, 1
        %s478 = smul.addr %s477, 8
        %s479 = scalar_lea.vmem %s0, %s478
        %p480 = pneg %p55
        %p481 = pneg %p52
        %p482 = scmp.lt.s32.totalorder %s26, 1
        %s483 = scalar_select %p482, %s26, 1
        %s484 = smul.addr %s483, 8
        %s485 = scalar_lea.vmem %s1, %s484
        %p486 = pneg %p81
        %p487 = pneg %p78
        %p488 = scmp.lt.s32.totalorder %s26, 1
        %s489 = scalar_select %p488, %s26, 1
        %s490 = smul.addr %s489, 8
        %s491 = scalar_lea.vmem %s2, %s490
        %p492 = pneg %p107
        %p493 = pneg %p104
        %p494 = scmp.lt.s32.totalorder %s26, 1
        %s495 = scalar_select %p494, %s26, 1
        %s496 = smul.addr %s495, 8
        %s497 = scalar_lea.vmem %s3, %s496
        %p498 = pneg %p133
        %p499 = pneg %p130
        %p500 = scmp.lt.s32.totalorder %s26, 1
        %s501 = scalar_select %p500, %s26, 1
        %s502 = smul.addr %s501, 8
        %s503 = scalar_lea.vmem %s4, %s502
        %p504 = pneg %p159
        %p505 = pneg %p156
        %s506 = sand.u32 %s174, 1
        %s507 = sand.u32 %s174, 1
        %s508 = smul.addr %s507, 64
        %s509 = scalar_lea.vmem [#allocation4], %s508
        %p510 = pneg %p187
        %p511 = pneg %p184
        %p512 = pneg %p208
        %p513 = pneg %p205
        %p514 = pneg %p229
        %p515 = pneg %p226
        %p516 = pneg %p250
        %p517 = pneg %p247
        %p518 = pneg %p271
        %p519 = pneg %p268
        %p520 = pneg %p292
        %p521 = pneg %p289
        %p522 = pneg %p320
        %p523 = pneg %p317
        %s524 = sand.u32 %s307, 1
        %s525 = sand.u32 %s307, 1
        %s526 = smul.addr %s525, 64
        %s527 = scalar_lea.vmem [#allocation5], %s526
        %p528 = scmp.lt.s32.totalorder %s26, 1
        %s529 = scalar_select %p528, %s26, 1
        %s530 = smul.addr %s529, 8
        %s531 = scalar_lea.vmem %s0, %s530
        %p532 = scmp.lt.s32.totalorder %s26, 1
        %s533 = scalar_select %p532, %s26, 1
        %s534 = smul.addr %s533, 8
        %s535 = scalar_lea.vmem %s1, %s534
        %p536 = scmp.lt.s32.totalorder %s26, 1
        %s537 = scalar_select %p536, %s26, 1
        %s538 = smul.addr %s537, 8
        %s539 = scalar_lea.vmem %s2, %s538
        %p540 = scmp.lt.s32.totalorder %s26, 1
        %s541 = scalar_select %p540, %s26, 1
        %s542 = smul.addr %s541, 8
        %s543 = scalar_lea.vmem %s3, %s542
        %p544 = scmp.lt.s32.totalorder %s26, 1
        %s545 = scalar_select %p544, %s26, 1
        %s546 = smul.addr %s545, 8
        %s547 = scalar_lea.vmem %s4, %s546
        %s548 = smul.u32 8, %s27
        %s549 = smul.u32 8, %s27
        %v551 = vld [vmem:[%s6] sm:$0xf]
        %v552 = vld [vmem:[%s6 + $0x4] sm:$0xf]
        %v553 = vld [vmem:[%s6 + $0x8] sm:$0xf]
        %v554 = vld [vmem:[%s6 + $0xc] sm:$0xf]
        %v555 = vld [vmem:[%s6 + $0x10] sm:$0xf]
        %v556 = vld [vmem:[%s6 + $0x14] sm:$0xf]
        %v557 = vld [vmem:[%s6 + $0x18] sm:$0xf]
        %v558 = vld [vmem:[%s6 + $0x1c] sm:$0xf]
        %v559 = vld [vmem:[%s6 + $0x20] sm:$0xf]
        %v560 = vld [vmem:[%s6 + $0x24] sm:$0xf]
        %v561 = vld [vmem:[%s6 + $0x28] sm:$0xf]
        %v562 = vld [vmem:[%s6 + $0x2c] sm:$0xf]
        %v563 = vld [vmem:[%s6 + $0x30] sm:$0xf]
        %v564 = vld [vmem:[%s6 + $0x34] sm:$0xf]
        %v565 = vld [vmem:[%s6 + $0x38] sm:$0xf]
        %v566 = vld [vmem:[%s6 + $0x3c] sm:$0xf]
        %v567 = vld [vmem:[%s7] sm:$0xf]
        %v568 = vld [vmem:[%s7 + $0x4] sm:$0xf]
        %v569 = vld [vmem:[%s7 + $0x8] sm:$0xf]
        %v570 = vld [vmem:[%s7 + $0xc] sm:$0xf]
        %v571 = vld [vmem:[%s8] sm:$0xf]
        %v572 = vld [vmem:[%s8 + $0x4] sm:$0xf]
        %v573 = vld [vmem:[%s8 + $0x8] sm:$0xf]
        %v574 = vld [vmem:[%s8 + $0xc] sm:$0xf]
        %v575 = vld [vmem:[%s539] sm:$0xff]
        %v576 = vld [vmem:[%s543] sm:$0xff]
        %v577 = vld [vmem:[%s547] sm:$0xff]
        %v578 = vld [vmem:[%s9] sm:$0x1]
        %v580 = vperm.slane %v578, 0
        %v582 = vld [vmem:[%s10] sm:$0x1]
        %v584 = vperm.slane %v582, 0
        %p586 = scmp.eq.s32.totalorder %s27, 0
        // Predicated region
        $region103: #{neural_advdiff_simulate.1} parent=97 // pred_check
          %p587 = pneg %p586
        $region104: #{neural_advdiff_simulate.1} parent=97 // pred_check_branch
          %589 = sbr.rel (%p587) target = $region106
        $region105: #{neural_advdiff_simulate.1} parent=97 // pred_region
          %v590 = vld [vmem:[%s531] sm:$0xff]
          %591 = vst [vmem:[#allocation2] sm:$0xff] %v590
          %v592 = vld [vmem:[%s535] sm:$0xff]
          %vm593 = vcmask 261120
          %594 = vst.msk [vmem:[#allocation3] sm:$0xff] %vm593, %v592
        $region106: #{neural_advdiff_simulate.1} parent=97 // pred_fallthru
          _
        %v595 = vld [vmem:[#allocation2] sm:$0xff]
        %v596 = vld [vmem:[#allocation3] sm:$0xff]
        %597 = vst [vmem:[%s527] sm:$0xff] %v595
        %v598 = vld [vmem:[%s472] sm:$0xff]
        %v599 = vadd.f32 %v596, %v598
        %v600 = vtanh.pop %v599
        %v601 = vpack.c.bf16 %v600, %v600
        %602 = vrot.lane.b32.xlu0 %v595, 127
        %v603 = vpop.permute.xlu0 %602
        %604 = vrot.lane.b32.xlu0 %v595, 1
        %v605 = vpop.permute.xlu0 %604
        %v606 = vmul.f32 %v575, %v603
        %v607 = vmul.f32 %v576, %v605
        %v608 = vadd.f32 %v606, %v607
        %v609 = vmul.f32 %v577, %v595
        %v610 = vadd.f32 %v608, %v609
        %v611 = vadd.f32 %v595, %v610
        %v616 = vunpack.c.l.b16 %v567
        %v617 = vunpack.c.l.b16 %v568
        %v618 = vunpack.c.l.b16 %v569
        %v619 = vunpack.c.l.b16 %v570
        %v620 = vpack.c.b16 %v617, %v616
        %v621 = vpack.c.b16 %v619, %v618
        %vm624 = vcmask 261120
        %v626 = vsel %vm624, %v601, 0
        %628 = vmatpush.bf16.msra.mxu0 0
        %629 = vmatpush.bf16.msra.mxu0 0
        %630 = vmatpush.bf16.msra.mxu0 0
        %631 = vmatpush.bf16.msra.mxu0 0
        %632 = vmatpush.bf16.msra.mxu0 0
        %633 = vmatpush.bf16.msra.mxu0 0
        %634 = vmatpush.bf16.msra.mxu0 %v621
        %635 = vmatpush.bf16.msra.mxu0 %v620
        %636 = vmatmul.bf16.gmra.mxu0 %v626
        %v637 = vpop.f32.mrf.mxu0
        %v638 = vadd.f32 0.0, %v637
        %v639 = vpop.f32.mrf.mxu0
        %640 = vdwg.mxu0
        %v641 = vadd.f32 %v611, %v638
        %v642 = vadd.f32 %v641, %v580
        %v643 = vadd.f32 %v596, %v584
        %v648 = vunpack.c.l.b16 %v571
        %v649 = vunpack.c.l.b16 %v572
        %v650 = vunpack.c.l.b16 %v573
        %v651 = vunpack.c.l.b16 %v574
        %v652 = vpack.c.b16 %v649, %v648
        %v653 = vpack.c.b16 %v651, %v650
        %656 = vmatpush.bf16.msra.mxu0 0
        %657 = vmatpush.bf16.msra.mxu0 0
        %658 = vmatpush.bf16.msra.mxu0 0
        %659 = vmatpush.bf16.msra.mxu0 0
        %660 = vmatpush.bf16.msra.mxu0 0
        %661 = vmatpush.bf16.msra.mxu0 0
        %662 = vmatpush.bf16.msra.mxu0 %v653
        %663 = vmatpush.bf16.msra.mxu0 %v652
        %664 = vmatmul.bf16.gmra.mxu0 %v626
        %v665 = vpop.f32.mrf.mxu0
        %v666 = vadd.f32 0.0, %v665
        %v667 = vpop.f32.mrf.mxu0
        %668 = vdwg.mxu0
        %v669 = vadd.f32 %v643, %v666
        %v670 = vpack.c.bf16 %v610, %v610
        %v687 = vunpack.c.l.b16 %v551
        %v688 = vunpack.c.l.b16 %v552
        %v689 = vunpack.c.l.b16 %v553
        %v690 = vunpack.c.l.b16 %v554
        %v691 = vunpack.c.l.b16 %v555
        %v692 = vunpack.c.l.b16 %v556
        %v693 = vunpack.c.l.b16 %v557
        %v694 = vunpack.c.l.b16 %v558
        %v695 = vunpack.c.l.b16 %v559
        %v696 = vunpack.c.l.b16 %v560
        %v697 = vunpack.c.l.b16 %v561
        %v698 = vunpack.c.l.b16 %v562
        %v699 = vunpack.c.l.b16 %v563
        %v700 = vunpack.c.l.b16 %v564
        %v701 = vunpack.c.l.b16 %v565
        %v702 = vunpack.c.l.b16 %v566
        %v703 = vpack.c.b16 %v688, %v687
        %v704 = vpack.c.b16 %v690, %v689
        %v705 = vpack.c.b16 %v692, %v691
        %v706 = vpack.c.b16 %v694, %v693
        %v707 = vpack.c.b16 %v696, %v695
        %v708 = vpack.c.b16 %v698, %v697
        %v709 = vpack.c.b16 %v700, %v699
        %v710 = vpack.c.b16 %v702, %v701
        %719 = vmatpush.bf16.msra.mxu0 %v710
        %720 = vmatpush.bf16.msra.mxu0 %v709
        %721 = vmatpush.bf16.msra.mxu0 %v708
        %722 = vmatpush.bf16.msra.mxu0 %v707
        %723 = vmatpush.bf16.msra.mxu0 %v706
        %724 = vmatpush.bf16.msra.mxu0 %v705
        %725 = vmatpush.bf16.msra.mxu0 %v704
        %726 = vmatpush.bf16.msra.mxu0 %v703
        %727 = vmatmul.bf16.gmra.mxu0 %v670
        %v728 = vpop.f32.mrf.mxu0
        %v729 = vadd.f32 0.0, %v728
        %v730 = vpop.f32.mrf.mxu0
        %731 = vdwg.mxu0
        %v732 = vadd.f32 %v669, %v729
        %s733 = scalar_lea.vmem %s527, 8 [#allocation5]
        %734 = vst [vmem:[%s733] sm:$0xff] %v642
        %s735 = scalar_lea.vmem %s472, 8 [#allocation4]
        %v736 = vld [vmem:[%s735] sm:$0xff]
        %v737 = vadd.f32 %v732, %v736
        %v738 = vtanh.pop %v737
        %v739 = vpack.c.bf16 %v738, %v738
        %740 = vrot.lane.b32.xlu0 %v642, 127
        %v741 = vpop.permute.xlu0 %740
        %742 = vrot.lane.b32.xlu0 %v642, 1
        %v743 = vpop.permute.xlu0 %742
        %v744 = vmul.f32 %v575, %v741
        %v745 = vmul.f32 %v576, %v743
        %v746 = vadd.f32 %v744, %v745
        %v747 = vmul.f32 %v577, %v642
        %v748 = vadd.f32 %v746, %v747
        %v749 = vadd.f32 %v642, %v748
        %v751 = vsel %vm624, %v739, 0
        %753 = vmatpush.bf16.msra.mxu0 0
        %754 = vmatpush.bf16.msra.mxu0 0
        %755 = vmatpush.bf16.msra.mxu0 0
        %756 = vmatpush.bf16.msra.mxu0 0
        %757 = vmatpush.bf16.msra.mxu0 0
        %758 = vmatpush.bf16.msra.mxu0 0
        %759 = vmatpush.bf16.msra.mxu0 %v621
        %760 = vmatpush.bf16.msra.mxu0 %v620
        %761 = vmatmul.bf16.gmra.mxu0 %v751
        %v762 = vpop.f32.mrf.mxu0
        %v763 = vadd.f32 0.0, %v762
        %v764 = vpop.f32.mrf.mxu0
        %765 = vdwg.mxu0
        %v766 = vadd.f32 %v749, %v763
        %v767 = vadd.f32 %v766, %v580
        %v768 = vadd.f32 %v732, %v584
        %769 = vmatpush.bf16.msra.mxu0 0
        %770 = vmatpush.bf16.msra.mxu0 0
        %771 = vmatpush.bf16.msra.mxu0 0
        %772 = vmatpush.bf16.msra.mxu0 0
        %773 = vmatpush.bf16.msra.mxu0 0
        %774 = vmatpush.bf16.msra.mxu0 0
        %775 = vmatpush.bf16.msra.mxu0 %v653
        %776 = vmatpush.bf16.msra.mxu0 %v652
        %777 = vmatmul.bf16.gmra.mxu0 %v751
        %v778 = vpop.f32.mrf.mxu0
        %v779 = vadd.f32 0.0, %v778
        %v780 = vpop.f32.mrf.mxu0
        %781 = vdwg.mxu0
        %v782 = vadd.f32 %v768, %v779
        %v783 = vpack.c.bf16 %v748, %v748
        %784 = vmatpush.bf16.msra.mxu0 %v710
        %785 = vmatpush.bf16.msra.mxu0 %v709
        %786 = vmatpush.bf16.msra.mxu0 %v708
        %787 = vmatpush.bf16.msra.mxu0 %v707
        %788 = vmatpush.bf16.msra.mxu0 %v706
        %789 = vmatpush.bf16.msra.mxu0 %v705
        %790 = vmatpush.bf16.msra.mxu0 %v704
        %791 = vmatpush.bf16.msra.mxu0 %v703
        %792 = vmatmul.bf16.gmra.mxu0 %v783
        %v793 = vpop.f32.mrf.mxu0
        %v794 = vadd.f32 0.0, %v793
        %v795 = vpop.f32.mrf.mxu0
        %796 = vdwg.mxu0
        %v797 = vadd.f32 %v782, %v794
        %s798 = scalar_lea.vmem %s527, 16 [#allocation5]
        %799 = vst [vmem:[%s798] sm:$0xff] %v767
        %s800 = scalar_lea.vmem %s472, 16 [#allocation4]
        %v801 = vld [vmem:[%s800] sm:$0xff]
        %v802 = vadd.f32 %v797, %v801
        %v803 = vtanh.pop %v802
        %v804 = vpack.c.bf16 %v803, %v803
        %805 = vrot.lane.b32.xlu0 %v767, 127
        %v806 = vpop.permute.xlu0 %805
        %807 = vrot.lane.b32.xlu0 %v767, 1
        %v808 = vpop.permute.xlu0 %807
        %v809 = vmul.f32 %v575, %v806
        %v810 = vmul.f32 %v576, %v808
        %v811 = vadd.f32 %v809, %v810
        %v812 = vmul.f32 %v577, %v767
        %v813 = vadd.f32 %v811, %v812
        %v814 = vadd.f32 %v767, %v813
        %v816 = vsel %vm624, %v804, 0
        %818 = vmatpush.bf16.msra.mxu0 0
        %819 = vmatpush.bf16.msra.mxu0 0
        %820 = vmatpush.bf16.msra.mxu0 0
        %821 = vmatpush.bf16.msra.mxu0 0
        %822 = vmatpush.bf16.msra.mxu0 0
        %823 = vmatpush.bf16.msra.mxu0 0
        %824 = vmatpush.bf16.msra.mxu0 %v621
        %825 = vmatpush.bf16.msra.mxu0 %v620
        %826 = vmatmul.bf16.gmra.mxu0 %v816
        %v827 = vpop.f32.mrf.mxu0
        %v828 = vadd.f32 0.0, %v827
        %v829 = vpop.f32.mrf.mxu0
        %830 = vdwg.mxu0
        %v831 = vadd.f32 %v814, %v828
        %v832 = vadd.f32 %v831, %v580
        %v833 = vadd.f32 %v797, %v584
        %834 = vmatpush.bf16.msra.mxu0 0
        %835 = vmatpush.bf16.msra.mxu0 0
        %836 = vmatpush.bf16.msra.mxu0 0
        %837 = vmatpush.bf16.msra.mxu0 0
        %838 = vmatpush.bf16.msra.mxu0 0
        %839 = vmatpush.bf16.msra.mxu0 0
        %840 = vmatpush.bf16.msra.mxu0 %v653
        %841 = vmatpush.bf16.msra.mxu0 %v652
        %842 = vmatmul.bf16.gmra.mxu0 %v816
        %v843 = vpop.f32.mrf.mxu0
        %v844 = vadd.f32 0.0, %v843
        %v845 = vpop.f32.mrf.mxu0
        %846 = vdwg.mxu0
        %v847 = vadd.f32 %v833, %v844
        %v848 = vpack.c.bf16 %v813, %v813
        %849 = vmatpush.bf16.msra.mxu0 %v710
        %850 = vmatpush.bf16.msra.mxu0 %v709
        %851 = vmatpush.bf16.msra.mxu0 %v708
        %852 = vmatpush.bf16.msra.mxu0 %v707
        %853 = vmatpush.bf16.msra.mxu0 %v706
        %854 = vmatpush.bf16.msra.mxu0 %v705
        %855 = vmatpush.bf16.msra.mxu0 %v704
        %856 = vmatpush.bf16.msra.mxu0 %v703
        %857 = vmatmul.bf16.gmra.mxu0 %v848
        %v858 = vpop.f32.mrf.mxu0
        %v859 = vadd.f32 0.0, %v858
        %v860 = vpop.f32.mrf.mxu0
        %861 = vdwg.mxu0
        %v862 = vadd.f32 %v847, %v859
        %s863 = scalar_lea.vmem %s527, 24 [#allocation5]
        %864 = vst [vmem:[%s863] sm:$0xff] %v832
        %s865 = scalar_lea.vmem %s472, 24 [#allocation4]
        %v866 = vld [vmem:[%s865] sm:$0xff]
        %v867 = vadd.f32 %v862, %v866
        %v868 = vtanh.pop %v867
        %v869 = vpack.c.bf16 %v868, %v868
        %870 = vrot.lane.b32.xlu0 %v832, 127
        %v871 = vpop.permute.xlu0 %870
        %872 = vrot.lane.b32.xlu0 %v832, 1
        %v873 = vpop.permute.xlu0 %872
        %v874 = vmul.f32 %v575, %v871
        %v875 = vmul.f32 %v576, %v873
        %v876 = vadd.f32 %v874, %v875
        %v877 = vmul.f32 %v577, %v832
        %v878 = vadd.f32 %v876, %v877
        %v879 = vadd.f32 %v832, %v878
        %v881 = vsel %vm624, %v869, 0
        %883 = vmatpush.bf16.msra.mxu0 0
        %884 = vmatpush.bf16.msra.mxu0 0
        %885 = vmatpush.bf16.msra.mxu0 0
        %886 = vmatpush.bf16.msra.mxu0 0
        %887 = vmatpush.bf16.msra.mxu0 0
        %888 = vmatpush.bf16.msra.mxu0 0
        %889 = vmatpush.bf16.msra.mxu0 %v621
        %890 = vmatpush.bf16.msra.mxu0 %v620
        %891 = vmatmul.bf16.gmra.mxu0 %v881
        %v892 = vpop.f32.mrf.mxu0
        %v893 = vadd.f32 0.0, %v892
        %v894 = vpop.f32.mrf.mxu0
        %895 = vdwg.mxu0
        %v896 = vadd.f32 %v879, %v893
        %v897 = vadd.f32 %v896, %v580
        %v898 = vadd.f32 %v862, %v584
        %899 = vmatpush.bf16.msra.mxu0 0
        %900 = vmatpush.bf16.msra.mxu0 0
        %901 = vmatpush.bf16.msra.mxu0 0
        %902 = vmatpush.bf16.msra.mxu0 0
        %903 = vmatpush.bf16.msra.mxu0 0
        %904 = vmatpush.bf16.msra.mxu0 0
        %905 = vmatpush.bf16.msra.mxu0 %v653
        %906 = vmatpush.bf16.msra.mxu0 %v652
        %907 = vmatmul.bf16.gmra.mxu0 %v881
        %v908 = vpop.f32.mrf.mxu0
        %v909 = vadd.f32 0.0, %v908
        %v910 = vpop.f32.mrf.mxu0
        %911 = vdwg.mxu0
        %v912 = vadd.f32 %v898, %v909
        %v913 = vpack.c.bf16 %v878, %v878
        %914 = vmatpush.bf16.msra.mxu0 %v710
        %915 = vmatpush.bf16.msra.mxu0 %v709
        %916 = vmatpush.bf16.msra.mxu0 %v708
        %917 = vmatpush.bf16.msra.mxu0 %v707
        %918 = vmatpush.bf16.msra.mxu0 %v706
        %919 = vmatpush.bf16.msra.mxu0 %v705
        %920 = vmatpush.bf16.msra.mxu0 %v704
        %921 = vmatpush.bf16.msra.mxu0 %v703
        %922 = vmatmul.bf16.gmra.mxu0 %v913
        %v923 = vpop.f32.mrf.mxu0
        %v924 = vadd.f32 0.0, %v923
        %v925 = vpop.f32.mrf.mxu0
        %926 = vdwg.mxu0
        %v927 = vadd.f32 %v912, %v924
        %s928 = scalar_lea.vmem %s527, 32 [#allocation5]
        %929 = vst [vmem:[%s928] sm:$0xff] %v897
        %s930 = scalar_lea.vmem %s472, 32 [#allocation4]
        %v931 = vld [vmem:[%s930] sm:$0xff]
        %v932 = vadd.f32 %v927, %v931
        %v933 = vtanh.pop %v932
        %v934 = vpack.c.bf16 %v933, %v933
        %935 = vrot.lane.b32.xlu0 %v897, 127
        %v936 = vpop.permute.xlu0 %935
        %937 = vrot.lane.b32.xlu0 %v897, 1
        %v938 = vpop.permute.xlu0 %937
        %v939 = vmul.f32 %v575, %v936
        %v940 = vmul.f32 %v576, %v938
        %v941 = vadd.f32 %v939, %v940
        %v942 = vmul.f32 %v577, %v897
        %v943 = vadd.f32 %v941, %v942
        %v944 = vadd.f32 %v897, %v943
        %v946 = vsel %vm624, %v934, 0
        %948 = vmatpush.bf16.msra.mxu0 0
        %949 = vmatpush.bf16.msra.mxu0 0
        %950 = vmatpush.bf16.msra.mxu0 0
        %951 = vmatpush.bf16.msra.mxu0 0
        %952 = vmatpush.bf16.msra.mxu0 0
        %953 = vmatpush.bf16.msra.mxu0 0
        %954 = vmatpush.bf16.msra.mxu0 %v621
        %955 = vmatpush.bf16.msra.mxu0 %v620
        %956 = vmatmul.bf16.gmra.mxu0 %v946
        %v957 = vpop.f32.mrf.mxu0
        %v958 = vadd.f32 0.0, %v957
        %v959 = vpop.f32.mrf.mxu0
        %960 = vdwg.mxu0
        %v961 = vadd.f32 %v944, %v958
        %v962 = vadd.f32 %v961, %v580
        %v963 = vadd.f32 %v927, %v584
        %964 = vmatpush.bf16.msra.mxu0 0
        %965 = vmatpush.bf16.msra.mxu0 0
        %966 = vmatpush.bf16.msra.mxu0 0
        %967 = vmatpush.bf16.msra.mxu0 0
        %968 = vmatpush.bf16.msra.mxu0 0
        %969 = vmatpush.bf16.msra.mxu0 0
        %970 = vmatpush.bf16.msra.mxu0 %v653
        %971 = vmatpush.bf16.msra.mxu0 %v652
        %972 = vmatmul.bf16.gmra.mxu0 %v946
        %v973 = vpop.f32.mrf.mxu0
        %v974 = vadd.f32 0.0, %v973
        %v975 = vpop.f32.mrf.mxu0
        %976 = vdwg.mxu0
        %v977 = vadd.f32 %v963, %v974
        %v978 = vpack.c.bf16 %v943, %v943
        %979 = vmatpush.bf16.msra.mxu0 %v710
        %980 = vmatpush.bf16.msra.mxu0 %v709
        %981 = vmatpush.bf16.msra.mxu0 %v708
        %982 = vmatpush.bf16.msra.mxu0 %v707
        %983 = vmatpush.bf16.msra.mxu0 %v706
        %984 = vmatpush.bf16.msra.mxu0 %v705
        %985 = vmatpush.bf16.msra.mxu0 %v704
        %986 = vmatpush.bf16.msra.mxu0 %v703
        %987 = vmatmul.bf16.gmra.mxu0 %v978
        %v988 = vpop.f32.mrf.mxu0
        %v989 = vadd.f32 0.0, %v988
        %v990 = vpop.f32.mrf.mxu0
        %991 = vdwg.mxu0
        %v992 = vadd.f32 %v977, %v989
        %s993 = scalar_lea.vmem %s527, 40 [#allocation5]
        %994 = vst [vmem:[%s993] sm:$0xff] %v962
        %s995 = scalar_lea.vmem %s472, 40 [#allocation4]
        %v996 = vld [vmem:[%s995] sm:$0xff]
        %v997 = vadd.f32 %v992, %v996
        %v998 = vtanh.pop %v997
        %v999 = vpack.c.bf16 %v998, %v998
        %1000 = vrot.lane.b32.xlu0 %v962, 127
        %v1001 = vpop.permute.xlu0 %1000
        %1002 = vrot.lane.b32.xlu0 %v962, 1
        %v1003 = vpop.permute.xlu0 %1002
        %v1004 = vmul.f32 %v575, %v1001
        %v1005 = vmul.f32 %v576, %v1003
        %v1006 = vadd.f32 %v1004, %v1005
        %v1007 = vmul.f32 %v577, %v962
        %v1008 = vadd.f32 %v1006, %v1007
        %v1009 = vadd.f32 %v962, %v1008
        %v1011 = vsel %vm624, %v999, 0
        %1013 = vmatpush.bf16.msra.mxu0 0
        %1014 = vmatpush.bf16.msra.mxu0 0
        %1015 = vmatpush.bf16.msra.mxu0 0
        %1016 = vmatpush.bf16.msra.mxu0 0
        %1017 = vmatpush.bf16.msra.mxu0 0
        %1018 = vmatpush.bf16.msra.mxu0 0
        %1019 = vmatpush.bf16.msra.mxu0 %v621
        %1020 = vmatpush.bf16.msra.mxu0 %v620
        %1021 = vmatmul.bf16.gmra.mxu0 %v1011
        %v1022 = vpop.f32.mrf.mxu0
        %v1023 = vadd.f32 0.0, %v1022
        %v1024 = vpop.f32.mrf.mxu0
        %1025 = vdwg.mxu0
        %v1026 = vadd.f32 %v1009, %v1023
        %v1027 = vadd.f32 %v1026, %v580
        %v1028 = vadd.f32 %v992, %v584
        %1029 = vmatpush.bf16.msra.mxu0 0
        %1030 = vmatpush.bf16.msra.mxu0 0
        %1031 = vmatpush.bf16.msra.mxu0 0
        %1032 = vmatpush.bf16.msra.mxu0 0
        %1033 = vmatpush.bf16.msra.mxu0 0
        %1034 = vmatpush.bf16.msra.mxu0 0
        %1035 = vmatpush.bf16.msra.mxu0 %v653
        %1036 = vmatpush.bf16.msra.mxu0 %v652
        %1037 = vmatmul.bf16.gmra.mxu0 %v1011
        %v1038 = vpop.f32.mrf.mxu0
        %v1039 = vadd.f32 0.0, %v1038
        %v1040 = vpop.f32.mrf.mxu0
        %1041 = vdwg.mxu0
        %v1042 = vadd.f32 %v1028, %v1039
        %v1043 = vpack.c.bf16 %v1008, %v1008
        %1044 = vmatpush.bf16.msra.mxu0 %v710
        %1045 = vmatpush.bf16.msra.mxu0 %v709
        %1046 = vmatpush.bf16.msra.mxu0 %v708
        %1047 = vmatpush.bf16.msra.mxu0 %v707
        %1048 = vmatpush.bf16.msra.mxu0 %v706
        %1049 = vmatpush.bf16.msra.mxu0 %v705
        %1050 = vmatpush.bf16.msra.mxu0 %v704
        %1051 = vmatpush.bf16.msra.mxu0 %v703
        %1052 = vmatmul.bf16.gmra.mxu0 %v1043
        %v1053 = vpop.f32.mrf.mxu0
        %v1054 = vadd.f32 0.0, %v1053
        %v1055 = vpop.f32.mrf.mxu0
        %1056 = vdwg.mxu0
        %v1057 = vadd.f32 %v1042, %v1054
        %s1058 = scalar_lea.vmem %s527, 48 [#allocation5]
        %1059 = vst [vmem:[%s1058] sm:$0xff] %v1027
        %s1060 = scalar_lea.vmem %s472, 48 [#allocation4]
        %v1061 = vld [vmem:[%s1060] sm:$0xff]
        %v1062 = vadd.f32 %v1057, %v1061
        %v1063 = vtanh.pop %v1062
        %v1064 = vpack.c.bf16 %v1063, %v1063
        %1065 = vrot.lane.b32.xlu0 %v1027, 127
        %v1066 = vpop.permute.xlu0 %1065
        %1067 = vrot.lane.b32.xlu0 %v1027, 1
        %v1068 = vpop.permute.xlu0 %1067
        %v1069 = vmul.f32 %v575, %v1066
        %v1070 = vmul.f32 %v576, %v1068
        %v1071 = vadd.f32 %v1069, %v1070
        %v1072 = vmul.f32 %v577, %v1027
        %v1073 = vadd.f32 %v1071, %v1072
        %v1074 = vadd.f32 %v1027, %v1073
        %v1076 = vsel %vm624, %v1064, 0
        %1078 = vmatpush.bf16.msra.mxu0 0
        %1079 = vmatpush.bf16.msra.mxu0 0
        %1080 = vmatpush.bf16.msra.mxu0 0
        %1081 = vmatpush.bf16.msra.mxu0 0
        %1082 = vmatpush.bf16.msra.mxu0 0
        %1083 = vmatpush.bf16.msra.mxu0 0
        %1084 = vmatpush.bf16.msra.mxu0 %v621
        %1085 = vmatpush.bf16.msra.mxu0 %v620
        %1086 = vmatmul.bf16.gmra.mxu0 %v1076
        %v1087 = vpop.f32.mrf.mxu0
        %v1088 = vadd.f32 0.0, %v1087
        %v1089 = vpop.f32.mrf.mxu0
        %1090 = vdwg.mxu0
        %v1091 = vadd.f32 %v1074, %v1088
        %v1092 = vadd.f32 %v1091, %v580
        %v1093 = vadd.f32 %v1057, %v584
        %1094 = vmatpush.bf16.msra.mxu0 0
        %1095 = vmatpush.bf16.msra.mxu0 0
        %1096 = vmatpush.bf16.msra.mxu0 0
        %1097 = vmatpush.bf16.msra.mxu0 0
        %1098 = vmatpush.bf16.msra.mxu0 0
        %1099 = vmatpush.bf16.msra.mxu0 0
        %1100 = vmatpush.bf16.msra.mxu0 %v653
        %1101 = vmatpush.bf16.msra.mxu0 %v652
        %1102 = vmatmul.bf16.gmra.mxu0 %v1076
        %v1103 = vpop.f32.mrf.mxu0
        %v1104 = vadd.f32 0.0, %v1103
        %v1105 = vpop.f32.mrf.mxu0
        %1106 = vdwg.mxu0
        %v1107 = vadd.f32 %v1093, %v1104
        %v1108 = vpack.c.bf16 %v1073, %v1073
        %1109 = vmatpush.bf16.msra.mxu0 %v710
        %1110 = vmatpush.bf16.msra.mxu0 %v709
        %1111 = vmatpush.bf16.msra.mxu0 %v708
        %1112 = vmatpush.bf16.msra.mxu0 %v707
        %1113 = vmatpush.bf16.msra.mxu0 %v706
        %1114 = vmatpush.bf16.msra.mxu0 %v705
        %1115 = vmatpush.bf16.msra.mxu0 %v704
        %1116 = vmatpush.bf16.msra.mxu0 %v703
        %1117 = vmatmul.bf16.gmra.mxu0 %v1108
        %v1118 = vpop.f32.mrf.mxu0
        %v1119 = vadd.f32 0.0, %v1118
        %v1120 = vpop.f32.mrf.mxu0
        %1121 = vdwg.mxu0
        %v1122 = vadd.f32 %v1107, %v1119
        %s1123 = scalar_lea.vmem %s527, 56 [#allocation5]
        %1124 = vst [vmem:[%s1123] sm:$0xff] %v1092
        %s1125 = scalar_lea.vmem %s472, 56 [#allocation4]
        %v1126 = vld [vmem:[%s1125] sm:$0xff]
        %v1127 = vadd.f32 %v1122, %v1126
        %v1128 = vtanh.pop %v1127
        %v1129 = vpack.c.bf16 %v1128, %v1128
        %1130 = vrot.lane.b32.xlu0 %v1092, 127
        %v1131 = vpop.permute.xlu0 %1130
        %1132 = vrot.lane.b32.xlu0 %v1092, 1
        %v1133 = vpop.permute.xlu0 %1132
        %v1134 = vmul.f32 %v575, %v1131
        %v1135 = vmul.f32 %v576, %v1133
        %v1136 = vadd.f32 %v1134, %v1135
        %v1137 = vmul.f32 %v577, %v1092
        %v1138 = vadd.f32 %v1136, %v1137
        %v1139 = vadd.f32 %v1092, %v1138
        %v1141 = vsel %vm624, %v1129, 0
        %1143 = vmatpush.bf16.msra.mxu0 0
        %1144 = vmatpush.bf16.msra.mxu0 0
        %1145 = vmatpush.bf16.msra.mxu0 0
        %1146 = vmatpush.bf16.msra.mxu0 0
        %1147 = vmatpush.bf16.msra.mxu0 0
        %1148 = vmatpush.bf16.msra.mxu0 0
        %1149 = vmatpush.bf16.msra.mxu0 %v621
        %1150 = vmatpush.bf16.msra.mxu0 %v620
        %1151 = vmatmul.bf16.gmra.mxu0 %v1141
        %v1152 = vpop.f32.mrf.mxu0
        %v1153 = vadd.f32 0.0, %v1152
        %v1154 = vpop.f32.mrf.mxu0
        %1155 = vdwg.mxu0
        %v1156 = vadd.f32 %v1139, %v1153
        %v1157 = vadd.f32 %v1156, %v580
        %v1158 = vadd.f32 %v1122, %v584
        %1159 = vmatpush.bf16.msra.mxu0 0
        %1160 = vmatpush.bf16.msra.mxu0 0
        %1161 = vmatpush.bf16.msra.mxu0 0
        %1162 = vmatpush.bf16.msra.mxu0 0
        %1163 = vmatpush.bf16.msra.mxu0 0
        %1164 = vmatpush.bf16.msra.mxu0 0
        %1165 = vmatpush.bf16.msra.mxu0 %v653
        %1166 = vmatpush.bf16.msra.mxu0 %v652
        %1167 = vmatmul.bf16.gmra.mxu0 %v1141
        %v1168 = vpop.f32.mrf.mxu0
        %v1169 = vadd.f32 0.0, %v1168
        %v1170 = vpop.f32.mrf.mxu0
        %1171 = vdwg.mxu0
        %v1172 = vadd.f32 %v1158, %v1169
        %v1173 = vpack.c.bf16 %v1138, %v1138
        %1174 = vmatpush.bf16.msra.mxu0 %v710
        %1175 = vmatpush.bf16.msra.mxu0 %v709
        %1176 = vmatpush.bf16.msra.mxu0 %v708
        %1177 = vmatpush.bf16.msra.mxu0 %v707
        %1178 = vmatpush.bf16.msra.mxu0 %v706
        %1179 = vmatpush.bf16.msra.mxu0 %v705
        %1180 = vmatpush.bf16.msra.mxu0 %v704
        %1181 = vmatpush.bf16.msra.mxu0 %v703
        %1182 = vmatmul.bf16.gmra.mxu0 %v1173
        %v1183 = vpop.f32.mrf.mxu0
        %v1184 = vadd.f32 0.0, %v1183
        %v1185 = vpop.f32.mrf.mxu0
        %1186 = vdwg.mxu0
        %v1187 = vadd.f32 %v1172, %v1184
        %1188 = vst [vmem:[#allocation2] sm:$0xff] %v1157
        %1189 = vst.msk [vmem:[#allocation3] sm:$0xff] %vm624, %v1187
        %s1190 = sand.u32 %s307, 1
        %s1191 = sand.u32 %s307, 1
        %s1192 = smul.addr %s1191, 64
        %s1193 = scalar_lea.vmem [#allocation5], %s1192
        // Predicated region
        $region107: #{neural_advdiff_simulate.1} parent=97 // pred_check
          %p1194 = pneg %p317
        $region108: #{neural_advdiff_simulate.1} parent=97 // pred_check_branch
          %1196 = sbr.rel (%p1194) target = $region110
        $region109: #{neural_advdiff_simulate.1} parent=97 // pred_region
          %s1197 = smul.u32 8, %s27
          %s1198 = smul.addr %s1197, 2
          %s1199 = sadd.s32 %s26, %s1198
          %s1200 = smul.addr %s1199, 8
          %s1201 = scalar_lea.vmem %s11, %s1200
          // Predicated region
          $region111: #{neural_advdiff_simulate.1} parent=109 // pred_check
            _
          $region112: #{neural_advdiff_simulate.1} parent=109 // pred_check_branch
            %1203 = sbr.rel (0) target = $region114
          $region113: #{neural_advdiff_simulate.1} parent=109 // pred_region
            // Predicated region
            $region115: #{neural_advdiff_simulate.1} parent=113 // pred_check
              _
            $region116: #{neural_advdiff_simulate.1} parent=113 // pred_check_branch
              %1205 = sbr.rel (0) target = $region118
            $region117: #{neural_advdiff_simulate.1} parent=113 // pred_region
              // Predicated region
              $region130: #{neural_advdiff_simulate.1} parent=117 // pred_check
                _
              $region131: #{neural_advdiff_simulate.1} parent=117 // pred_check_branch
                %1235 = sbr.rel (0) target = $region133
              $region132: #{neural_advdiff_simulate.1} parent=117 // pred_region
                loop: start=0, step=1, limit=1
                $region134: #{neural_advdiff_simulate.1} parent=132 // loop_pre_header
                  _
                $region135: #{neural_advdiff_simulate.1} parent=132 // loop_header
                  %s1237 = sphi 0, %s1241
                  %p1238 = scmp.ge.s32.totalorder %s1237, 1
                  %s1242 = sphi %s1193, %s1193
                  %s1243 = sphi %s1201, %s1201
                $region136: #{neural_advdiff_simulate.1} parent=132 // loop_header_branch
                  %1240 = sbr.rel (%p1238) target = $region140
                $region137: #{neural_advdiff_simulate.1} parent=132 // loop_body
                  %v1244 = vld [vmem:[%s1242] sm:$0xff]
                  %1245 = vst [vmem:[%s1243] sm:$0xff] %v1244
                  %v1246 = vld [vmem:[%s1242 + $0x8] sm:$0xff]
                  %1247 = vst [vmem:[%s1243 + $0x10] sm:$0xff] %v1246
                  %v1248 = vld [vmem:[%s1242 + $0x10] sm:$0xff]
                  %1249 = vst [vmem:[%s1243 + $0x20] sm:$0xff] %v1248
                  %v1250 = vld [vmem:[%s1242 + $0x18] sm:$0xff]
                  %1251 = vst [vmem:[%s1243 + $0x30] sm:$0xff] %v1250
                  %v1252 = vld [vmem:[%s1242 + $0x20] sm:$0xff]
                  %1253 = vst [vmem:[%s1243 + $0x40] sm:$0xff] %v1252
                  %v1254 = vld [vmem:[%s1242 + $0x28] sm:$0xff]
                  %1255 = vst [vmem:[%s1243 + $0x50] sm:$0xff] %v1254
                  %v1256 = vld [vmem:[%s1242 + $0x30] sm:$0xff]
                  %1257 = vst [vmem:[%s1243 + $0x60] sm:$0xff] %v1256
                  %v1258 = vld [vmem:[%s1242 + $0x38] sm:$0xff]
                  %1259 = vst [vmem:[%s1243 + $0x70] sm:$0xff] %v1258
                $region138: #{neural_advdiff_simulate.1} parent=132 // loop_footer
                  %s1241 = sadd.s32 1, %s1237
                $region139: #{neural_advdiff_simulate.1} parent=132 // loop_footer_branch
                  %1236 = sbr.rel target = $region135
                $region140: #{neural_advdiff_simulate.1} parent=132 // loop_exit
                  _
              $region133: #{neural_advdiff_simulate.1} parent=117 // pred_fallthru
                _
              // Predicated region
              $region141: #{neural_advdiff_simulate.1} parent=117 // pred_check
                _
              $region142: #{neural_advdiff_simulate.1} parent=117 // pred_check_branch
                %1261 = sbr.rel target = $region144
              $region143: #{neural_advdiff_simulate.1} parent=117 // pred_region
                _
              $region144: #{neural_advdiff_simulate.1} parent=117 // pred_fallthru
                _
            $region118: #{neural_advdiff_simulate.1} parent=113 // pred_fallthru
              _
            // Predicated region
            $region119: #{neural_advdiff_simulate.1} parent=113 // pred_check
              _
            $region120: #{neural_advdiff_simulate.1} parent=113 // pred_check_branch
              %1207 = sbr.rel target = $region122
            $region121: #{neural_advdiff_simulate.1} parent=113 // pred_region
              %s1209 = ssub.s32 256, 1
              loop: start=0, step=1, limit=1
              $region123: #{neural_advdiff_simulate.1} parent=121 // loop_pre_header
                _
              $region124: #{neural_advdiff_simulate.1} parent=121 // loop_header
                %s1211 = sphi 0, %s1215
                %p1212 = scmp.ge.s32.totalorder %s1211, 1
                %s1216 = sphi %s1193, %s1193
                %s1217 = sphi %s1201, %s1201
              $region125: #{neural_advdiff_simulate.1} parent=121 // loop_header_branch
                %1214 = sbr.rel (%p1212) target = $region129
              $region126: #{neural_advdiff_simulate.1} parent=121 // loop_body
                %v1218 = vld [vmem:[%s1216] sm:%s1209]
                %1219 = vst [vmem:[%s1217] sm:%s1209] %v1218
                %v1220 = vld [vmem:[%s1216 + $0x8] sm:%s1209]
                %1221 = vst [vmem:[%s1217 + $0x10] sm:%s1209] %v1220
                %v1222 = vld [vmem:[%s1216 + $0x10] sm:%s1209]
                %1223 = vst [vmem:[%s1217 + $0x20] sm:%s1209] %v1222
                %v1224 = vld [vmem:[%s1216 + $0x18] sm:%s1209]
                %1225 = vst [vmem:[%s1217 + $0x30] sm:%s1209] %v1224
                %v1226 = vld [vmem:[%s1216 + $0x20] sm:%s1209]
                %1227 = vst [vmem:[%s1217 + $0x40] sm:%s1209] %v1226
                %v1228 = vld [vmem:[%s1216 + $0x28] sm:%s1209]
                %1229 = vst [vmem:[%s1217 + $0x50] sm:%s1209] %v1228
                %v1230 = vld [vmem:[%s1216 + $0x30] sm:%s1209]
                %1231 = vst [vmem:[%s1217 + $0x60] sm:%s1209] %v1230
                %v1232 = vld [vmem:[%s1216 + $0x38] sm:%s1209]
                %1233 = vst [vmem:[%s1217 + $0x70] sm:%s1209] %v1232
              $region127: #{neural_advdiff_simulate.1} parent=121 // loop_footer
                %s1215 = sadd.s32 1, %s1211
              $region128: #{neural_advdiff_simulate.1} parent=121 // loop_footer_branch
                %1210 = sbr.rel target = $region124
              $region129: #{neural_advdiff_simulate.1} parent=121 // loop_exit
                _
            $region122: #{neural_advdiff_simulate.1} parent=113 // pred_fallthru
              _
          $region114: #{neural_advdiff_simulate.1} parent=109 // pred_fallthru
            _
          %1262 = vnop
        $region110: #{neural_advdiff_simulate.1} parent=97 // pred_fallthru
          _
      $region98: #{neural_advdiff_simulate.1} parent=5 // pred_fallthru
        _
      %p1263 = scmp.le.s32.totalorder 2, %s17
      // Predicated region
      $region145: #{neural_advdiff_simulate.1} parent=5 // pred_check
        %p1264 = pneg %p1263
      $region146: #{neural_advdiff_simulate.1} parent=5 // pred_check_branch
        %1266 = sbr.rel (%p1264) target = $region148
      $region147: #{neural_advdiff_simulate.1} parent=5 // pred_region
        %s1267 = ssub.s32 %s17, 2
        // Predicated region
        $region149: #{neural_advdiff_simulate.1} parent=147 // pred_check
          %p1268 = pneg %p323
        $region150: #{neural_advdiff_simulate.1} parent=147 // pred_check_branch
          %1270 = sbr.rel (%p1268) target = $region152
        $region151: #{neural_advdiff_simulate.1} parent=147 // pred_region
          %s1271 = sand.u32 %s308, 1
          %s1272 = sand.u32 %s308, 1
          %s1273 = smul.addr %s1272, 64
          %s1274 = scalar_lea.vmem [#allocation5], %s1273
        $region152: #{neural_advdiff_simulate.1} parent=147 // pred_fallthru
          _
      $region148: #{neural_advdiff_simulate.1} parent=5 // pred_fallthru
        _
    $region6: #{neural_advdiff_simulate.1} parent=1 // loop_footer
      %s21 = sadd.s32 1, %s17
    $region7: #{neural_advdiff_simulate.1} parent=1 // loop_footer_branch
      %16 = sbr.rel target = $region3
    $region8: #{neural_advdiff_simulate.1} parent=1 // loop_exit
      _

</llo_original>
